<compile_context>
chip_gen: v7x
topology: tpu7x:2x2x1
jax: 0.10.0
libtpu: 0.0.40
codegen_flags: <defaults>
</compile_context>

<pallas_src>
import functools
import math

import jax
import jax.numpy as jnp
from jax.experimental import pallas as pl
from jax.experimental.pallas import tpu as pltpu


_SQRT_2_OVER_PI = 0.7978845608028654


def _gelu_tanh(x):
    # TODO(synk): torch nn.GELU() default is exact erf-GELU; tanh approximation
    # (max deviation ~1e-3) is used so the transcendental maps to the EUP slot.
    return 0.5 * x * (1.0 + jnp.tanh(_SQRT_2_OVER_PI * (x + 0.044715 * x * x * x)))


def _layernorm(x, gamma, beta, eps):
    # Two-pass (centered) variance: safer than E[x^2] - E[x]^2 against cancellation.
    mean = jnp.mean(x, axis=-1, keepdims=True)
    c = x - mean
    var = jnp.mean(c * c, axis=-1, keepdims=True)
    return c * jax.lax.rsqrt(var + eps) * gamma + beta


# ----------------------------------------------------------------------------
# Kernels
# ----------------------------------------------------------------------------

def _qkv_kernel(x_ref, w_ref, b_ref, q_ref, k_ref, v_ref):
    """[q|k|v] = x @ Wqkv^T + bqkv for one (tm, H) row tile; Wqkv VMEM-resident."""
    acc = jnp.dot(x_ref[...], w_ref[...], preferred_element_type=jnp.float32)
    acc = acc + b_ref[...]
    a = q_ref.shape[-1]
    q_ref[...] = acc[:, :a].astype(q_ref.dtype)
    k_ref[...] = acc[:, a:2 * a].astype(k_ref.dtype)
    v_ref[...] = acc[:, 2 * a:].astype(v_ref.dtype)


def _attn_kernel(q_ref, k_ref, v_ref, m_ref, o_ref, *, num_heads, head_size):
    """softmax(q k^T + mask) v for one batch; loops heads, writes (S, A) slab.

    The 1/sqrt(d) scale is already folded into the query projection.
    """
    mask = m_ref[...]                       # (1, S) additive mask, f32
    outs = []
    for h in range(num_heads):
        lo, hi = h * head_size, (h + 1) * head_size
        q = q_ref[:, lo:hi]
        k = k_ref[:, lo:hi]
        v = v_ref[:, lo:hi]
        s = jax.lax.dot_general(q, k, (((1,), (1,)), ((), ())),
                                preferred_element_type=jnp.float32)
        s = s + mask
        s = s - jnp.max(s, axis=-1, keepdims=True)
        p = jnp.exp(s)
        l = jnp.sum(p, axis=-1, keepdims=True)
        # TODO(synk): attention-prob dropout is identity in eval mode.
        o = jnp.dot(p.astype(v.dtype), v, preferred_element_type=jnp.float32)
        outs.append(o * pl.reciprocal(l, approx=True))   # deferred normalization
    o_ref[...] = jnp.concatenate(outs, axis=-1).astype(o_ref.dtype)


def _ffn_chain_kernel(ctx_ref, res_ref, wo_ref, bo_ref, g1_ref, b1_ref,
                      wi_ref, bi_ref, wo2_ref, bo2_ref, g2_ref, b2_ref,
                      out_ref, out_bf_ref, *, eps):
    """SelfOutput -> Intermediate -> Output fused for one (tm, *) row tile."""
    # SelfOutput: LayerNorm(ctx @ Wo^T + bo + residual)
    h = jnp.dot(ctx_ref[...], wo_ref[...], preferred_element_type=jnp.float32)
    h = h + bo_ref[...] + res_ref[...]
    attn_out = _layernorm(h, g1_ref[...], b1_ref[...], eps)
    # Intermediate: gelu(attn_out @ Wi^T + bi)
    inter = jnp.dot(attn_out.astype(wi_ref.dtype), wi_ref[...],
                    preferred_element_type=jnp.float32) + bi_ref[...]
    inter = _gelu_tanh(inter)
    # Output: LayerNorm(inter @ W2^T + b2 + attn_out)
    o = jnp.dot(inter.astype(wo2_ref.dtype), wo2_ref[...],
                preferred_element_type=jnp.float32)
    o = o + bo2_ref[...] + attn_out
    y = _layernorm(o, g2_ref[...], b2_ref[...], eps)
    # TODO(synk): hidden-dropout layers are identity in eval mode.
    out_ref[...] = y.astype(out_ref.dtype)          # f32 residual stream
    out_bf_ref[...] = y.astype(out_bf_ref.dtype)    # bf16 operand for next matmul


# ----------------------------------------------------------------------------
# Wrappers
# ----------------------------------------------------------------------------

_PHYS_VMEM = None


def _physical_vmem_bytes():
    global _PHYS_VMEM
    if _PHYS_VMEM is None:
        try:
            _PHYS_VMEM = int(pltpu.get_tpu_info().vmem_capacity_bytes)
        except Exception:
            _PHYS_VMEM = 64 << 20      # conservative (v7x-sized) fallback
    return _PHYS_VMEM


def _vmem_limit(resident_bytes, per_step_bytes):
    # Weights are double-buffered (no Buffered(1)); streamed tiles ~2-3 buffers.
    cap = _physical_vmem_bytes() - (16 << 20)   # headroom for Mosaic scratch
    limit = 2 * resident_bytes + 3 * per_step_bytes + (8 << 20)
    return int(max(min(limit, cap), min(32 << 20, cap)))


def _pick_tm(m, tm):
    """Largest row tile <= tm that divides M (avoids jnp.pad / slice copies)."""
    tm = min(tm, m)
    if m % tm == 0:
        return tm
    for t in range(tm, 7, -1):
        if m % t == 0 and t % 8 == 0:
            return t
    return m


def fused_qkv_linear(x, w_t, bias, *, out_dtype=None, tm=512):
    """x: [M, H]; w_t: [H, 3A] (pre-transposed, scale folded); bias: [3A].

    Returns (q, k, v), each [M, A]."""
    M, K = x.shape
    N3 = w_t.shape[1]
    A = N3 // 3
    out_dtype = out_dtype or x.dtype
    tm = _pick_tm(M, tm)
    grid_m = M // tm

    b2 = bias.reshape(1, N3).astype(jnp.float32)
    out_isz = jnp.dtype(out_dtype).itemsize

    cost = pl.CostEstimate(
        flops=int(2 * M * K * N3),
        transcendentals=0,
        bytes_accessed=int(M * K * x.dtype.itemsize + K * N3 * w_t.dtype.itemsize
                           + N3 * 4 + M * N3 * out_isz))
    resident = K * N3 * w_t.dtype.itemsize + N3 * 4
    per_step = tm * (K * x.dtype.itemsize + N3 * (out_isz + 4))

    q, k, v = pl.pallas_call(
        _qkv_kernel,
        out_shape=tuple(jax.ShapeDtypeStruct((M, A), out_dtype) for _ in range(3)),
        grid_spec=pltpu.PrefetchScalarGridSpec(
            num_scalar_prefetch=0,
            grid=(grid_m,),
            in_specs=[
                pl.BlockSpec((tm, K), lambda i: (i, 0)),   # activations (streamed)
                pl.BlockSpec((K, N3), lambda i: (0, 0)),   # Wqkv^T (VMEM-resident)
                pl.BlockSpec((1, N3), lambda i: (0, 0)),   # bias
            ],
            out_specs=tuple(pl.BlockSpec((tm, A), lambda i: (i, 0)) for _ in range(3)),
        ),
        compiler_params=pltpu.CompilerParams(
            dimension_semantics=("parallel",),
            vmem_limit_bytes=_vmem_limit(resident, per_step)),
        cost_estimate=cost,
    )(x, w_t, b2)
    return q, k, v


def mha_attention(q, k, v, mask, *, batch, seq, num_heads, head_size):
    """q/k/v: [B*S, A] (head-major columns); mask: additive [B, 1, S] f32."""
    M, A = q.shape
    isz = q.dtype.itemsize
    cost = pl.CostEstimate(
        flops=int(4 * batch * num_heads * seq * seq * head_size),
        transcendentals=int(batch * num_heads * seq * seq),
        bytes_accessed=int(4 * M * A * isz + batch * seq * 4))
    per_step = 4 * seq * A * isz + 2 * seq * seq * 4

    return pl.pallas_call(
        functools.partial(_attn_kernel, num_heads=num_heads, head_size=head_size),
        out_shape=jax.ShapeDtypeStruct((M, A), q.dtype),
        grid_spec=pltpu.PrefetchScalarGridSpec(
            num_scalar_prefetch=0,
            grid=(batch,),
            in_specs=[
                pl.BlockSpec((seq, A), lambda b: (b, 0)),
                pl.BlockSpec((seq, A), lambda b: (b, 0)),
                pl.BlockSpec((seq, A), lambda b: (b, 0)),
                pl.BlockSpec((None, 1, seq), lambda b: (b, 0, 0)),
            ],
            out_specs=pl.BlockSpec((seq, A), lambda b: (b, 0)),
        ),
        compiler_params=pltpu.CompilerParams(
            dimension_semantics=("parallel",),
            vmem_limit_bytes=_vmem_limit(0, per_step)),
        cost_estimate=cost,
    )(q, k, v, mask)


def fused_attention_output_ffn(ctx, residual, p, *, eps, tm=512):
    """LayerNorm(W2(gelu(Wi(LayerNorm(Wo(ctx)+res))))+...) fused per row tile.

    ctx: [M, A] (compute dtype), residual: [M, H] f32.
    Returns (out_f32 [M, H], out_bf16 [M, H])."""
    M, A = ctx.shape
    H = residual.shape[1]
    I = p["wi_t"].shape[1]
    tm = _pick_tm(M, tm)
    grid_m = M // tm

    wo, wi, wo2 = p["wo_t"], p["wi_t"], p["wo2_t"]
    bo = p["bo"].reshape(1, H).astype(jnp.float32)
    g1 = p["g1"].reshape(1, H).astype(jnp.float32)
    b1 = p["b1"].reshape(1, H).astype(jnp.float32)
    bi = p["bi"].reshape(1, I).astype(jnp.float32)
    bo2 = p["bo2"].reshape(1, H).astype(jnp.float32)
    g2 = p["g2"].reshape(1, H).astype(jnp.float32)
    b2 = p["b2"].reshape(1, H).astype(jnp.float32)

    wbytes = (A * H + H * I + I * H) * wo.dtype.itemsize
    cisz = ctx.dtype.itemsize
    cost = pl.CostEstimate(
        flops=int(2 * M * A * H + 4 * M * H * I + 16 * M * H + 8 * M * I),
        transcendentals=int(M * I + 4 * M),
        bytes_accessed=int(M * A * cisz + M * H * 4 + wbytes + (5 * H + I) * 4
                           + M * H * (4 + cisz)))
    resident = wbytes + (5 * H + I) * 4
    per_step = tm * (A * cisz + 2 * H * 4 + H * cisz) + tm * I * 4 + tm * H * 8

    out_f32, out_bf = pl.pallas_call(
        functools.partial(_ffn_chain_kernel, eps=eps),
        out_shape=(jax.ShapeDtypeStruct((M, H), jnp.float32),
                   jax.ShapeDtypeStruct((M, H), ctx.dtype)),
        grid_spec=pltpu.PrefetchScalarGridSpec(
            num_scalar_prefetch=0,
            grid=(grid_m,),
            in_specs=[
                pl.BlockSpec((tm, A), lambda i: (i, 0)),   # ctx (streamed)
                pl.BlockSpec((tm, H), lambda i: (i, 0)),   # residual (streamed)
                pl.BlockSpec((A, H), lambda i: (0, 0)),    # Wo^T  (VMEM-resident)
                pl.BlockSpec((1, H), lambda i: (0, 0)),    # bo
                pl.BlockSpec((1, H), lambda i: (0, 0)),    # LN1 gamma
                pl.BlockSpec((1, H), lambda i: (0, 0)),    # LN1 beta
                pl.BlockSpec((H, I), lambda i: (0, 0)),    # Wi^T  (VMEM-resident)
                pl.BlockSpec((1, I), lambda i: (0, 0)),    # bi
                pl.BlockSpec((I, H), lambda i: (0, 0)),    # Wo2^T (VMEM-resident)
                pl.BlockSpec((1, H), lambda i: (0, 0)),    # bo2
                pl.BlockSpec((1, H), lambda i: (0, 0)),    # LN2 gamma
                pl.BlockSpec((1, H), lambda i: (0, 0)),    # LN2 beta
            ],
            out_specs=(pl.BlockSpec((tm, H), lambda i: (i, 0)),
                       pl.BlockSpec((tm, H), lambda i: (i, 0))),
        ),
        compiler_params=pltpu.CompilerParams(
            dimension_semantics=("parallel",),
            vmem_limit_bytes=_vmem_limit(resident, per_step)),
        cost_estimate=cost,
    )(ctx, residual, wo, bo, g1, b1, wi, bi, wo2, bo2, g2, b2)
    return out_f32, out_bf


# ----------------------------------------------------------------------------
# Encoder forward
# ----------------------------------------------------------------------------

def bert_encoder_forward(x, layer_params, mask=None, *, num_heads, eps,
                         compute_dtype=jnp.bfloat16, tm=512):
    """x: [B, S, H].  Returns [B, S, H] in float32."""
    B, S, H = x.shape
    head_size = H // num_heads
    M = B * S
    if mask is None:
        mask = jnp.zeros((B, 1, 1, S), jnp.float32)
    mask2 = mask.reshape(B, 1, S).astype(jnp.float32)

    h32 = x.reshape(M, H).astype(jnp.float32)       # f32 residual stream
    hbf = h32.astype(compute_dtype)                 # bf16 matmul operand
    for p in layer_params:
        A = p["wq_t"].shape[1]
        nh = A // head_size
        scale = 1.0 / math.sqrt(head_size)
        # Fuse Q/K/V into one matmul; fold the softmax scale into Wq/bq for free.
        wqkv = jnp.concatenate([p["wq_t"] * scale, p["wk_t"], p["wv_t"]],
                               axis=1).astype(compute_dtype)
        bqkv = jnp.concatenate([p["bq"] * scale, p["bk"], p["bv"]], axis=0)

        q, k, v = fused_qkv_linear(hbf, wqkv, bqkv, out_dtype=compute_dtype, tm=tm)
        ctx = mha_attention(q, k, v, mask2, batch=B, seq=S,
                            num_heads=nh, head_size=head_size)

        pc = {name: (val.astype(compute_dtype)
                     if name in ("wo_t", "wi_t", "wo2_t") else val)
              for name, val in p.items()}
        h32, hbf = fused_attention_output_ffn(ctx, h32, pc, eps=eps, tm=tm)
    return h32.reshape(B, S, H)


# ----------------------------------------------------------------------------
# Pure-JAX reference (same precision policy: bf16 matmul operands, f32 epilogues)
# ----------------------------------------------------------------------------

def _ref_encoder(x, layer_params, mask, *, num_heads, eps, compute_dtype):
    B, S, H = x.shape
    head_size = H // num_heads
    if mask is None:
        mask = jnp.zeros((B, 1, 1, S), jnp.float32)
    mask = mask.astype(jnp.float32)

    def lin(xm, w_t, b):
        return (jnp.dot(xm.astype(compute_dtype), w_t.astype(compute_dtype),
                        preferred_element_type=jnp.float32)
                + b.astype(jnp.float32))

    def layernorm(v, g, b_):
        mean = jnp.mean(v, axis=-1, keepdims=True)
        var = jnp.mean(jnp.square(v - mean), axis=-1, keepdims=True)
        return (v - mean) * jax.lax.rsqrt(var + eps) * g + b_

    h = x.astype(jnp.float32).reshape(B * S, H)
    for p in layer_params:
        A = p["wq_t"].shape[1]
        nh = A // head_size
        q = lin(h, p["wq_t"], p["bq"]).astype(compute_dtype)
        k = lin(h, p["wk_t"], p["bk"]).astype(compute_dtype)
        v = lin(h, p["wv_t"], p["bv"]).astype(compute_dtype)

        def split(t):
            return t.reshape(B, S, nh, head_size).transpose(0, 2, 1, 3)

        qh, kh, vh = split(q), split(k), split(v)
        scale = 1.0 / math.sqrt(head_size)
        s = jnp.einsum("bhqd,bhkd->bhqk", qh, kh,
                       preferred_element_type=jnp.float32) * scale + mask
        s = s - jnp.max(s, axis=-1, keepdims=True)
        e = jnp.exp(s)
        probs = e / jnp.sum(e, axis=-1, keepdims=True)
        ctx = jnp.einsum("bhqk,bhkd->bhqd", probs.astype(compute_dtype), vh,
                         preferred_element_type=jnp.float32).astype(compute_dtype)
        ctx = ctx.transpose(0, 2, 1, 3).reshape(B * S, A)

        attn_out = layernorm(lin(ctx, p["wo_t"], p["bo"]) + h, p["g1"], p["b1"])
        inter = _gelu_tanh(lin(attn_out, p["wi_t"], p["bi"])).astype(compute_dtype)
        h = layernorm(lin(inter, p["wo2_t"], p["bo2"]) + attn_out, p["g2"], p["b2"])
    return h.reshape(B, S, H)


# ----------------------------------------------------------------------------
# Synthetic parameters + test
# ----------------------------------------------------------------------------

def init_layer_params(key, hidden, attn_dim, inter):
    ks = jax.random.split(key, 12)
    w = lambda k, i, o: jax.random.normal(k, (i, o), jnp.float32) * 0.02
    b = lambda k, o: jax.random.normal(k, (o,), jnp.float32) * 0.02
    return {
        # weights are stored pre-transposed ([in, out] == torch W^T)
        "wq_t": w(ks[0], hidden, attn_dim), "bq": b(ks[1], attn_dim),
        "wk_t": w(ks[2], hidden, attn_dim), "bk": b(ks[3], attn_dim),
        "wv_t": w(ks[4], hidden, attn_dim), "bv": b(ks[5], attn_dim),
        "wo_t": w(ks[6], attn_dim, hidden), "bo": b(ks[7], hidden),
        "g1": jnp.ones((hidden,), jnp.float32), "b1": jnp.zeros((hidden,), jnp.float32),
        "wi_t": w(ks[8], hidden, inter), "bi": b(ks[9], inter),
        "wo2_t": w(ks[10], inter, hidden), "bo2": b(ks[11], hidden),
        "g2": jnp.ones((hidden,), jnp.float32), "b2": jnp.zeros((hidden,), jnp.float32),
    }


if __name__ == "__main__":
    # Small synthetic config: batch=2, seq=8, hidden=32, 4 heads (head_size=8),
    # attention_dim=32, intermediate=64, 2 layers.  (Real BERT: H=768, I=3072,
    # which are 128-multiples and hit lane-dense stores + 256-aligned MXU tiles.)
    B, S = 2, 8
    hidden, heads, attn_dim, inter, n_layers = 32, 4, 32, 64, 2
    eps = 1e-12

    key = jax.random.PRNGKey(0)
    kx, kp = jax.random.split(key)
    x = jax.random.normal(kx, (B, S, hidden), jnp.float32)

    layer_keys = jax.random.split(kp, n_layers)
    params = [init_layer_params(k, hidden, attn_dim, inter) for k in layer_keys]

    # Additive attention mask [B, 1, 1, S]: mask out last two tokens of batch 1.
    mask = jnp.zeros((B, 1, 1, S), jnp.float32).at[1, 0, 0, -2:].set(-1e4)

    run = jax.jit(functools.partial(
        bert_encoder_forward, num_heads=heads, eps=eps,
        compute_dtype=jnp.bfloat16, tm=512))
    out = run(x, params, mask)
    jax.block_until_ready(out)

    ref = _ref_encoder(x, params, mask, num_heads=heads, eps=eps,
                       compute_dtype=jnp.bfloat16)
    assert out.shape == (B, S, hidden)
    err = float(jnp.max(jnp.abs(out - ref)))
    assert jnp.allclose(out, ref, atol=2e-2, rtol=2e-2), f"mismatch vs reference: {err}"

    print("KERNEL_OK")
</pallas_src>

<mosaic_0001>
module attributes {stable_mosaic.version = 11 : i64} {
  func.func @_qkv_kernel(%arg0: i32, %arg1: memref<16x32xbf16, #tpu.memory_space<vmem>>, %arg2: memref<32x96xbf16, #tpu.memory_space<vmem>>, %arg3: memref<1x96xf32, #tpu.memory_space<vmem>>, %arg4: memref<16x32xbf16, #tpu.memory_space<vmem>>, %arg5: memref<16x32xbf16, #tpu.memory_space<vmem>>, %arg6: memref<16x32xbf16, #tpu.memory_space<vmem>>) attributes {dimension_semantics = [#tpu.dimension_semantics<parallel>], iteration_bounds = array<i64: 1>, scalar_prefetch = 0 : i64, scratch_operands = 0 : i64, tpu.core_type = #tpu.core_type<tc>, window_params = [{transform_indices = @transform_0, window_bounds = array<i64: 16, 32>}, {pipeline_mode = #tpu.pipeline_mode<synchronous>, transform_indices = @transform_1, window_bounds = array<i64: 32, 96>}, {pipeline_mode = #tpu.pipeline_mode<synchronous>, transform_indices = @transform_2, window_bounds = array<i64: 1, 96>}, {transform_indices = @transform_3, window_bounds = array<i64: 16, 32>}, {transform_indices = @transform_4, window_bounds = array<i64: 16, 32>}, {transform_indices = @transform_5, window_bounds = array<i64: 16, 32>}]} {
    %c0 = arith.constant 0 : index
    %c0_0 = arith.constant 0 : index
    %0 = vector.load %arg1[%c0, %c0_0] : memref<16x32xbf16, #tpu.memory_space<vmem>>, vector<16x32xbf16>
    %c0_1 = arith.constant 0 : index
    %c0_2 = arith.constant 0 : index
    %1 = vector.load %arg2[%c0_1, %c0_2] : memref<32x96xbf16, #tpu.memory_space<vmem>>, vector<32x96xbf16>
    %cst = arith.constant dense<0.000000e+00> : vector<16x96xf32>
    %2 = tpu.matmul %0, %1, %cst {dimension_numbers = #tpu.dot_dimension_numbers<[1], [0], [0], [1], [0, 0, 1, 1], [], []>} : vector<16x32xbf16>, vector<32x96xbf16>, vector<16x96xf32> -> vector<16x96xf32>
    %c0_3 = arith.constant 0 : index
    %c0_4 = arith.constant 0 : index
    %3 = vector.load %arg3[%c0_3, %c0_4] : memref<1x96xf32, #tpu.memory_space<vmem>>, vector<1x96xf32>
    %4 = vector.broadcast %3 : vector<1x96xf32> to vector<16x96xf32>
    %5 = arith.addf %2, %4 : vector<16x96xf32>
    %6 = vector.extract_strided_slice %5 {offsets = [0, 0], sizes = [16, 32], strides = [1, 1]} : vector<16x96xf32> to vector<16x32xf32>
    %7 = arith.truncf %6 : vector<16x32xf32> to vector<16x32xbf16>
    %c0_5 = arith.constant 0 : index
    %c0_6 = arith.constant 0 : index
    %8 = vector.load %arg4[%c0_5, %c0_6] : memref<16x32xbf16, #tpu.memory_space<vmem>>, vector<16x32xbf16>
    tpu.vector_store %arg4[%c0_5, %c0_6], %7 {strides = array<i32>} : memref<16x32xbf16, #tpu.memory_space<vmem>>, vector<16x32xbf16>,
    %9 = vector.extract_strided_slice %5 {offsets = [0, 32], sizes = [16, 32], strides = [1, 1]} : vector<16x96xf32> to vector<16x32xf32>
    %10 = arith.truncf %9 : vector<16x32xf32> to vector<16x32xbf16>
    %c0_7 = arith.constant 0 : index
    %c0_8 = arith.constant 0 : index
    %11 = vector.load %arg5[%c0_7, %c0_8] : memref<16x32xbf16, #tpu.memory_space<vmem>>, vector<16x32xbf16>
    tpu.vector_store %arg5[%c0_7, %c0_8], %10 {strides = array<i32>} : memref<16x32xbf16, #tpu.memory_space<vmem>>, vector<16x32xbf16>,
    %12 = vector.extract_strided_slice %5 {offsets = [0, 64], sizes = [16, 32], strides = [1, 1]} : vector<16x96xf32> to vector<16x32xf32>
    %13 = arith.truncf %12 : vector<16x32xf32> to vector<16x32xbf16>
    %c0_9 = arith.constant 0 : index
    %c0_10 = arith.constant 0 : index
    %14 = vector.load %arg6[%c0_9, %c0_10] : memref<16x32xbf16, #tpu.memory_space<vmem>>, vector<16x32xbf16>
    tpu.vector_store %arg6[%c0_9, %c0_10], %13 {strides = array<i32>} : memref<16x32xbf16, #tpu.memory_space<vmem>>, vector<16x32xbf16>,
    return
  }
  func.func @transform_0(%arg0: i32) -> (i32, i32) {
    %c0_i32 = arith.constant 0 : i32
    %c0_i32_0 = arith.constant 0 : i32
    return %arg0, %c0_i32 : i32, i32
  }
  func.func @transform_1(%arg0: i32) -> (i32, i32) {
    %c0_i32 = arith.constant 0 : i32
    %c0_i32_0 = arith.constant 0 : i32
    %c0_i32_1 = arith.constant 0 : i32
    return %c0_i32, %c0_i32_0 : i32, i32
  }
  func.func @transform_2(%arg0: i32) -> (i32, i32) {
    %c0_i32 = arith.constant 0 : i32
    %c0_i32_0 = arith.constant 0 : i32
    %c0_i32_1 = arith.constant 0 : i32
    return %c0_i32, %c0_i32_0 : i32, i32
  }
  func.func @transform_3(%arg0: i32) -> (i32, i32) {
    %c0_i32 = arith.constant 0 : i32
    %c0_i32_0 = arith.constant 0 : i32
    return %arg0, %c0_i32 : i32, i32
  }
  func.func @transform_4(%arg0: i32) -> (i32, i32) {
    %c0_i32 = arith.constant 0 : i32
    %c0_i32_0 = arith.constant 0 : i32
    return %arg0, %c0_i32 : i32, i32
  }
  func.func @transform_5(%arg0: i32) -> (i32, i32) {
    %c0_i32 = arith.constant 0 : i32
    %c0_i32_0 = arith.constant 0 : i32
    return %arg0, %c0_i32 : i32, i32
  }
}

module attributes {stable_mosaic.version = 11 : i64} {
  func.func @_attn_kernel(%arg0: i32, %arg1: memref<8x32xbf16, #tpu.memory_space<vmem>>, %arg2: memref<8x32xbf16, #tpu.memory_space<vmem>>, %arg3: memref<8x32xbf16, #tpu.memory_space<vmem>>, %arg4: memref<1x1x8xf32, #tpu.memory_space<vmem>>, %arg5: memref<8x32xbf16, #tpu.memory_space<vmem>>) attributes {dimension_semantics = [#tpu.dimension_semantics<parallel>], iteration_bounds = array<i64: 2>, scalar_prefetch = 0 : i64, scratch_operands = 0 : i64, tpu.core_type = #tpu.core_type<tc>, window_params = [{transform_indices = @transform_0, window_bounds = array<i64: 8, 32>}, {transform_indices = @transform_1, window_bounds = array<i64: 8, 32>}, {transform_indices = @transform_2, window_bounds = array<i64: 8, 32>}, {transform_indices = @transform_3, window_bounds = array<i64: 1, 1, 8>}, {transform_indices = @transform_4, window_bounds = array<i64: 8, 32>}]} {
    %c0 = arith.constant 0 : index
    %c0_0 = arith.constant 0 : index
    %c0_1 = arith.constant 0 : index
    %0 = vector.load %arg4[%c0, %c0_0, %c0_1] : memref<1x1x8xf32, #tpu.memory_space<vmem>>, vector<1x1x8xf32>
    %1 = vector.shape_cast %0 : vector<1x1x8xf32> to vector<1x8xf32>
    %c0_2 = arith.constant 0 : index
    %c0_3 = arith.constant 0 : index
    %2 = vector.load %arg1[%c0_2, %c0_3] : memref<8x32xbf16, #tpu.memory_space<vmem>>, vector<8x8xbf16>
    %c0_4 = arith.constant 0 : index
    %c0_5 = arith.constant 0 : index
    %3 = vector.load %arg2[%c0_4, %c0_5] : memref<8x32xbf16, #tpu.memory_space<vmem>>, vector<8x8xbf16>
    %c0_6 = arith.constant 0 : index
    %c0_7 = arith.constant 0 : index
    %4 = vector.load %arg3[%c0_6, %c0_7] : memref<8x32xbf16, #tpu.memory_space<vmem>>, vector<8x8xbf16>
    %cst = arith.constant dense<0.000000e+00> : vector<8x8xf32>
    %5 = tpu.matmul %2, %3, %cst {dimension_numbers = #tpu.dot_dimension_numbers<[1], [1], [0], [0], [0, 0, 1, 0], [], []>} : vector<8x8xbf16>, vector<8x8xbf16>, vector<8x8xf32> -> vector<8x8xf32>
    %6 = vector.broadcast %1 : vector<1x8xf32> to vector<8x8xf32>
    %7 = arith.addf %5, %6 : vector<8x8xf32>
    %cst_8 = arith.constant dense<0xFF800000> : vector<8xf32>
    %8 = vector.multi_reduction <maximumf>, %7, %cst_8 [1] : vector<8x8xf32> to vector<8xf32>
    %9 = vector.shape_cast %8 : vector<8xf32> to vector<8x1xf32>
    %10 = vector.broadcast %9 : vector<8x1xf32> to vector<8x8xf32>
    %11 = arith.subf %7, %10 : vector<8x8xf32>
    %12 = math.exp %11 : vector<8x8xf32>
    %cst_9 = arith.constant dense<0.000000e+00> : vector<8xf32>
    %13 = vector.multi_reduction <add>, %12, %cst_9 [1] : vector<8x8xf32> to vector<8xf32>
    %14 = vector.shape_cast %13 : vector<8xf32> to vector<8x1xf32>
    %15 = arith.truncf %12 : vector<8x8xf32> to vector<8x8xbf16>
    %cst_10 = arith.constant dense<0.000000e+00> : vector<8x8xf32>
    %16 = tpu.matmul %15, %4, %cst_10 {dimension_numbers = #tpu.dot_dimension_numbers<[1], [0], [0], [1], [0, 0, 1, 1], [], []>} : vector<8x8xbf16>, vector<8x8xbf16>, vector<8x8xf32> -> vector<8x8xf32>
    %17 = tpu.reciprocal %14 {approx = true} : vector<8x1xf32> -> vector<8x1xf32>
    %18 = vector.broadcast %17 : vector<8x1xf32> to vector<8x8xf32>
    %19 = arith.mulf %16, %18 : vector<8x8xf32>
    %c0_11 = arith.constant 0 : index
    %c8 = arith.constant 8 : index
    %20 = vector.load %arg1[%c0_11, %c8] : memref<8x32xbf16, #tpu.memory_space<vmem>>, vector<8x8xbf16>
    %c0_12 = arith.constant 0 : index
    %c8_13 = arith.constant 8 : index
    %21 = vector.load %arg2[%c0_12, %c8_13] : memref<8x32xbf16, #tpu.memory_space<vmem>>, vector<8x8xbf16>
    %c0_14 = arith.constant 0 : index
    %c8_15 = arith.constant 8 : index
    %22 = vector.load %arg3[%c0_14, %c8_15] : memref<8x32xbf16, #tpu.memory_space<vmem>>, vector<8x8xbf16>
    %cst_16 = arith.constant dense<0.000000e+00> : vector<8x8xf32>
    %23 = tpu.matmul %20, %21, %cst_16 {dimension_numbers = #tpu.dot_dimension_numbers<[1], [1], [0], [0], [0, 0, 1, 0], [], []>} : vector<8x8xbf16>, vector<8x8xbf16>, vector<8x8xf32> -> vector<8x8xf32>
    %24 = vector.broadcast %1 : vector<1x8xf32> to vector<8x8xf32>
    %25 = arith.addf %23, %24 : vector<8x8xf32>
    %cst_17 = arith.constant dense<0xFF800000> : vector<8xf32>
    %26 = vector.multi_reduction <maximumf>, %25, %cst_17 [1] : vector<8x8xf32> to vector<8xf32>
    %27 = vector.shape_cast %26 : vector<8xf32> to vector<8x1xf32>
    %28 = vector.broadcast %27 : vector<8x1xf32> to vector<8x8xf32>
    %29 = arith.subf %25, %28 : vector<8x8xf32>
    %30 = math.exp %29 : vector<8x8xf32>
    %cst_18 = arith.constant dense<0.000000e+00> : vector<8xf32>
    %31 = vector.multi_reduction <add>, %30, %cst_18 [1] : vector<8x8xf32> to vector<8xf32>
    %32 = vector.shape_cast %31 : vector<8xf32> to vector<8x1xf32>
    %33 = arith.truncf %30 : vector<8x8xf32> to vector<8x8xbf16>
    %cst_19 = arith.constant dense<0.000000e+00> : vector<8x8xf32>
    %34 = tpu.matmul %33, %22, %cst_19 {dimension_numbers = #tpu.dot_dimension_numbers<[1], [0], [0], [1], [0, 0, 1, 1], [], []>} : vector<8x8xbf16>, vector<8x8xbf16>, vector<8x8xf32> -> vector<8x8xf32>
    %35 = tpu.reciprocal %32 {approx = true} : vector<8x1xf32> -> vector<8x1xf32>
    %36 = vector.broadcast %35 : vector<8x1xf32> to vector<8x8xf32>
    %37 = arith.mulf %34, %36 : vector<8x8xf32>
    %c0_20 = arith.constant 0 : index
    %c16 = arith.constant 16 : index
    %38 = vector.load %arg1[%c0_20, %c16] : memref<8x32xbf16, #tpu.memory_space<vmem>>, vector<8x8xbf16>
    %c0_21 = arith.constant 0 : index
    %c16_22 = arith.constant 16 : index
    %39 = vector.load %arg2[%c0_21, %c16_22] : memref<8x32xbf16, #tpu.memory_space<vmem>>, vector<8x8xbf16>
    %c0_23 = arith.constant 0 : index
    %c16_24 = arith.constant 16 : index
    %40 = vector.load %arg3[%c0_23, %c16_24] : memref<8x32xbf16, #tpu.memory_space<vmem>>, vector<8x8xbf16>
    %cst_25 = arith.constant dense<0.000000e+00> : vector<8x8xf32>
    %41 = tpu.matmul %38, %39, %cst_25 {dimension_numbers = #tpu.dot_dimension_numbers<[1], [1], [0], [0], [0, 0, 1, 0], [], []>} : vector<8x8xbf16>, vector<8x8xbf16>, vector<8x8xf32> -> vector<8x8xf32>
    %42 = vector.broadcast %1 : vector<1x8xf32> to vector<8x8xf32>
    %43 = arith.addf %41, %42 : vector<8x8xf32>
    %cst_26 = arith.constant dense<0xFF800000> : vector<8xf32>
    %44 = vector.multi_reduction <maximumf>, %43, %cst_26 [1] : vector<8x8xf32> to vector<8xf32>
    %45 = vector.shape_cast %44 : vector<8xf32> to vector<8x1xf32>
    %46 = vector.broadcast %45 : vector<8x1xf32> to vector<8x8xf32>
    %47 = arith.subf %43, %46 : vector<8x8xf32>
    %48 = math.exp %47 : vector<8x8xf32>
    %cst_27 = arith.constant dense<0.000000e+00> : vector<8xf32>
    %49 = vector.multi_reduction <add>, %48, %cst_27 [1] : vector<8x8xf32> to vector<8xf32>
    %50 = vector.shape_cast %49 : vector<8xf32> to vector<8x1xf32>
    %51 = arith.truncf %48 : vector<8x8xf32> to vector<8x8xbf16>
    %cst_28 = arith.constant dense<0.000000e+00> : vector<8x8xf32>
    %52 = tpu.matmul %51, %40, %cst_28 {dimension_numbers = #tpu.dot_dimension_numbers<[1], [0], [0], [1], [0, 0, 1, 1], [], []>} : vector<8x8xbf16>, vector<8x8xbf16>, vector<8x8xf32> -> vector<8x8xf32>
    %53 = tpu.reciprocal %50 {approx = true} : vector<8x1xf32> -> vector<8x1xf32>
    %54 = vector.broadcast %53 : vector<8x1xf32> to vector<8x8xf32>
    %55 = arith.mulf %52, %54 : vector<8x8xf32>
    %c0_29 = arith.constant 0 : index
    %c24 = arith.constant 24 : index
    %56 = vector.load %arg1[%c0_29, %c24] : memref<8x32xbf16, #tpu.memory_space<vmem>>, vector<8x8xbf16>
    %c0_30 = arith.constant 0 : index
    %c24_31 = arith.constant 24 : index
    %57 = vector.load %arg2[%c0_30, %c24_31] : memref<8x32xbf16, #tpu.memory_space<vmem>>, vector<8x8xbf16>
    %c0_32 = arith.constant 0 : index
    %c24_33 = arith.constant 24 : index
    %58 = vector.load %arg3[%c0_32, %c24_33] : memref<8x32xbf16, #tpu.memory_space<vmem>>, vector<8x8xbf16>
    %cst_34 = arith.constant dense<0.000000e+00> : vector<8x8xf32>
    %59 = tpu.matmul %56, %57, %cst_34 {dimension_numbers = #tpu.dot_dimension_numbers<[1], [1], [0], [0], [0, 0, 1, 0], [], []>} : vector<8x8xbf16>, vector<8x8xbf16>, vector<8x8xf32> -> vector<8x8xf32>
    %60 = vector.broadcast %1 : vector<1x8xf32> to vector<8x8xf32>
    %61 = arith.addf %59, %60 : vector<8x8xf32>
    %cst_35 = arith.constant dense<0xFF800000> : vector<8xf32>
    %62 = vector.multi_reduction <maximumf>, %61, %cst_35 [1] : vector<8x8xf32> to vector<8xf32>
    %63 = vector.shape_cast %62 : vector<8xf32> to vector<8x1xf32>
    %64 = vector.broadcast %63 : vector<8x1xf32> to vector<8x8xf32>
    %65 = arith.subf %61, %64 : vector<8x8xf32>
    %66 = math.exp %65 : vector<8x8xf32>
    %cst_36 = arith.constant dense<0.000000e+00> : vector<8xf32>
    %67 = vector.multi_reduction <add>, %66, %cst_36 [1] : vector<8x8xf32> to vector<8xf32>
    %68 = vector.shape_cast %67 : vector<8xf32> to vector<8x1xf32>
    %69 = arith.truncf %66 : vector<8x8xf32> to vector<8x8xbf16>
    %cst_37 = arith.constant dense<0.000000e+00> : vector<8x8xf32>
    %70 = tpu.matmul %69, %58, %cst_37 {dimension_numbers = #tpu.dot_dimension_numbers<[1], [0], [0], [1], [0, 0, 1, 1], [], []>} : vector<8x8xbf16>, vector<8x8xbf16>, vector<8x8xf32> -> vector<8x8xf32>
    %71 = tpu.reciprocal %68 {approx = true} : vector<8x1xf32> -> vector<8x1xf32>
    %72 = vector.broadcast %71 : vector<8x1xf32> to vector<8x8xf32>
    %73 = arith.mulf %70, %72 : vector<8x8xf32>
    %74 = tpu.concatenate %19, %37, %55, %73 in 1 : vector<8x8xf32>, vector<8x8xf32>, vector<8x8xf32>, vector<8x8xf32> -> vector<8x32xf32>
    %75 = arith.truncf %74 : vector<8x32xf32> to vector<8x32xbf16>
    %c0_38 = arith.constant 0 : index
    %c0_39 = arith.constant 0 : index
    %76 = vector.load %arg5[%c0_38, %c0_39] : memref<8x32xbf16, #tpu.memory_space<vmem>>, vector<8x32xbf16>
    tpu.vector_store %arg5[%c0_38, %c0_39], %75 {strides = array<i32>} : memref<8x32xbf16, #tpu.memory_space<vmem>>, vector<8x32xbf16>,
    return
  }
  func.func @transform_0(%arg0: i32) -> (i32, i32) {
    %c0_i32 = arith.constant 0 : i32
    %c0_i32_0 = arith.constant 0 : i32
    return %arg0, %c0_i32 : i32, i32
  }
  func.func @transform_1(%arg0: i32) -> (i32, i32) {
    %c0_i32 = arith.constant 0 : i32
    %c0_i32_0 = arith.constant 0 : i32
    return %arg0, %c0_i32 : i32, i32
  }
  func.func @transform_2(%arg0: i32) -> (i32, i32) {
    %c0_i32 = arith.constant 0 : i32
    %c0_i32_0 = arith.constant 0 : i32
    return %arg0, %c0_i32 : i32, i32
  }
  func.func @transform_3(%arg0: i32) -> (i32, i32, i32) {
    %c0_i32 = arith.constant 0 : i32
    %c0_i32_0 = arith.constant 0 : i32
    %c0_i32_1 = arith.constant 0 : i32
    return %arg0, %c0_i32, %c0_i32_0 : i32, i32, i32
  }
  func.func @transform_4(%arg0: i32) -> (i32, i32) {
    %c0_i32 = arith.constant 0 : i32
    %c0_i32_0 = arith.constant 0 : i32
    return %arg0, %c0_i32 : i32, i32
  }
}

module attributes {stable_mosaic.version = 11 : i64} {
  func.func @_ffn_chain_kernel(%arg0: i32, %arg1: memref<16x32xbf16, #tpu.memory_space<vmem>>, %arg2: memref<16x32xf32, #tpu.memory_space<vmem>>, %arg3: memref<32x32xbf16, #tpu.memory_space<vmem>>, %arg4: memref<1x32xf32, #tpu.memory_space<vmem>>, %arg5: memref<1x32xf32, #tpu.memory_space<vmem>>, %arg6: memref<1x32xf32, #tpu.memory_space<vmem>>, %arg7: memref<32x64xbf16, #tpu.memory_space<vmem>>, %arg8: memref<1x64xf32, #tpu.memory_space<vmem>>, %arg9: memref<64x32xbf16, #tpu.memory_space<vmem>>, %arg10: memref<1x32xf32, #tpu.memory_space<vmem>>, %arg11: memref<1x32xf32, #tpu.memory_space<vmem>>, %arg12: memref<1x32xf32, #tpu.memory_space<vmem>>, %arg13: memref<16x32xf32, #tpu.memory_space<vmem>>, %arg14: memref<16x32xbf16, #tpu.memory_space<vmem>>) attributes {dimension_semantics = [#tpu.dimension_semantics<parallel>], iteration_bounds = array<i64: 1>, scalar_prefetch = 0 : i64, scratch_operands = 0 : i64, tpu.core_type = #tpu.core_type<tc>, window_params = [{transform_indices = @transform_0, window_bounds = array<i64: 16, 32>}, {transform_indices = @transform_1, window_bounds = array<i64: 16, 32>}, {pipeline_mode = #tpu.pipeline_mode<synchronous>, transform_indices = @transform_2, window_bounds = array<i64: 32, 32>}, {pipeline_mode = #tpu.pipeline_mode<synchronous>, transform_indices = @transform_3, window_bounds = array<i64: 1, 32>}, {pipeline_mode = #tpu.pipeline_mode<synchronous>, transform_indices = @transform_4, window_bounds = array<i64: 1, 32>}, {pipeline_mode = #tpu.pipeline_mode<synchronous>, transform_indices = @transform_5, window_bounds = array<i64: 1, 32>}, {pipeline_mode = #tpu.pipeline_mode<synchronous>, transform_indices = @transform_6, window_bounds = array<i64: 32, 64>}, {pipeline_mode = #tpu.pipeline_mode<synchronous>, transform_indices = @transform_7, window_bounds = array<i64: 1, 64>}, {pipeline_mode = #tpu.pipeline_mode<synchronous>, transform_indices = @transform_8, window_bounds = array<i64: 64, 32>}, {pipeline_mode = #tpu.pipeline_mode<synchronous>, transform_indices = @transform_9, window_bounds = array<i64: 1, 32>}, {pipeline_mode = #tpu.pipeline_mode<synchronous>, transform_indices = @transform_10, window_bounds = array<i64: 1, 32>}, {pipeline_mode = #tpu.pipeline_mode<synchronous>, transform_indices = @transform_11, window_bounds = array<i64: 1, 32>}, {transform_indices = @transform_12, window_bounds = array<i64: 16, 32>}, {transform_indices = @transform_13, window_bounds = array<i64: 16, 32>}]} {
    %c0 = arith.constant 0 : index
    %c0_0 = arith.constant 0 : index
    %0 = vector.load %arg1[%c0, %c0_0] : memref<16x32xbf16, #tpu.memory_space<vmem>>, vector<16x32xbf16>
    %c0_1 = arith.constant 0 : index
    %c0_2 = arith.constant 0 : index
    %1 = vector.load %arg3[%c0_1, %c0_2] : memref<32x32xbf16, #tpu.memory_space<vmem>>, vector<32x32xbf16>
    %cst = arith.constant dense<0.000000e+00> : vector<16x32xf32>
    %2 = tpu.matmul %0, %1, %cst {dimension_numbers = #tpu.dot_dimension_numbers<[1], [0], [0], [1], [0, 0, 1, 1], [], []>} : vector<16x32xbf16>, vector<32x32xbf16>, vector<16x32xf32> -> vector<16x32xf32>
    %c0_3 = arith.constant 0 : index
    %c0_4 = arith.constant 0 : index
    %3 = vector.load %arg4[%c0_3, %c0_4] : memref<1x32xf32, #tpu.memory_space<vmem>>, vector<1x32xf32>
    %4 = vector.broadcast %3 : vector<1x32xf32> to vector<16x32xf32>
    %5 = arith.addf %2, %4 : vector<16x32xf32>
    %c0_5 = arith.constant 0 : index
    %c0_6 = arith.constant 0 : index
    %6 = vector.load %arg2[%c0_5, %c0_6] : memref<16x32xf32, #tpu.memory_space<vmem>>, vector<16x32xf32>
    %7 = arith.addf %5, %6 : vector<16x32xf32>
    %c0_7 = arith.constant 0 : index
    %c0_8 = arith.constant 0 : index
    %8 = vector.load %arg5[%c0_7, %c0_8] : memref<1x32xf32, #tpu.memory_space<vmem>>, vector<1x32xf32>
    %c0_9 = arith.constant 0 : index
    %c0_10 = arith.constant 0 : index
    %9 = vector.load %arg6[%c0_9, %c0_10] : memref<1x32xf32, #tpu.memory_space<vmem>>, vector<1x32xf32>
    %cst_11 = arith.constant dense<0.000000e+00> : vector<16xf32>
    %10 = vector.multi_reduction <add>, %7, %cst_11 [1] : vector<16x32xf32> to vector<16xf32>
    %11 = vector.shape_cast %10 : vector<16xf32> to vector<16x1xf32>
    %cst_12 = arith.constant 3.200000e+01 : f32
    %12 = vector.broadcast %cst_12 : f32 to vector<16x1xf32>
    %13 = arith.divf %11, %12 : vector<16x1xf32>
    %14 = vector.broadcast %13 : vector<16x1xf32> to vector<16x32xf32>
    %15 = arith.subf %7, %14 : vector<16x32xf32>
    %16 = arith.mulf %15, %15 : vector<16x32xf32>
    %cst_13 = arith.constant dense<0.000000e+00> : vector<16xf32>
    %17 = vector.multi_reduction <add>, %16, %cst_13 [1] : vector<16x32xf32> to vector<16xf32>
    %18 = vector.shape_cast %17 : vector<16xf32> to vector<16x1xf32>
    %cst_14 = arith.constant 3.200000e+01 : f32
    %19 = vector.broadcast %cst_14 : f32 to vector<16x1xf32>
    %20 = arith.divf %18, %19 : vector<16x1xf32>
    %cst_15 = arith.constant 9.99999996E-13 : f32
    %21 = vector.broadcast %cst_15 : f32 to vector<16x1xf32>
    %22 = arith.addf %20, %21 : vector<16x1xf32>
    %23 = math.rsqrt %22 : vector<16x1xf32>
    %24 = vector.broadcast %23 : vector<16x1xf32> to vector<16x32xf32>
    %25 = arith.mulf %15, %24 : vector<16x32xf32>
    %26 = vector.broadcast %8 : vector<1x32xf32> to vector<16x32xf32>
    %27 = arith.mulf %25, %26 : vector<16x32xf32>
    %28 = vector.broadcast %9 : vector<1x32xf32> to vector<16x32xf32>
    %29 = arith.addf %27, %28 : vector<16x32xf32>
    %30 = arith.truncf %29 : vector<16x32xf32> to vector<16x32xbf16>
    %c0_16 = arith.constant 0 : index
    %c0_17 = arith.constant 0 : index
    %31 = vector.load %arg7[%c0_16, %c0_17] : memref<32x64xbf16, #tpu.memory_space<vmem>>, vector<32x64xbf16>
    %cst_18 = arith.constant dense<0.000000e+00> : vector<16x64xf32>
    %32 = tpu.matmul %30, %31, %cst_18 {dimension_numbers = #tpu.dot_dimension_numbers<[1], [0], [0], [1], [0, 0, 1, 1], [], []>} : vector<16x32xbf16>, vector<32x64xbf16>, vector<16x64xf32> -> vector<16x64xf32>
    %c0_19 = arith.constant 0 : index
    %c0_20 = arith.constant 0 : index
    %33 = vector.load %arg8[%c0_19, %c0_20] : memref<1x64xf32, #tpu.memory_space<vmem>>, vector<1x64xf32>
    %34 = vector.broadcast %33 : vector<1x64xf32> to vector<16x64xf32>
    %35 = arith.addf %32, %34 : vector<16x64xf32>
    %cst_21 = arith.constant 5.000000e-01 : f32
    %36 = vector.broadcast %cst_21 : f32 to vector<16x64xf32>
    %37 = arith.mulf %36, %35 : vector<16x64xf32>
    %cst_22 = arith.constant 4.471500e-02 : f32
    %38 = vector.broadcast %cst_22 : f32 to vector<16x64xf32>
    %39 = arith.mulf %38, %35 : vector<16x64xf32>
    %40 = arith.mulf %39, %35 : vector<16x64xf32>
    %41 = arith.mulf %40, %35 : vector<16x64xf32>
    %42 = arith.addf %35, %41 : vector<16x64xf32>
    %cst_23 = arith.constant 0.797884583 : f32
    %43 = vector.broadcast %cst_23 : f32 to vector<16x64xf32>
    %44 = arith.mulf %43, %42 : vector<16x64xf32>
    %45 = math.tanh %44 : vector<16x64xf32>
    %cst_24 = arith.constant 1.000000e+00 : f32
    %46 = vector.broadcast %cst_24 : f32 to vector<16x64xf32>
    %47 = arith.addf %46, %45 : vector<16x64xf32>
    %48 = arith.mulf %37, %47 : vector<16x64xf32>
    %49 = arith.truncf %48 : vector<16x64xf32> to vector<16x64xbf16>
    %c0_25 = arith.constant 0 : index
    %c0_26 = arith.constant 0 : index
    %50 = vector.load %arg9[%c0_25, %c0_26] : memref<64x32xbf16, #tpu.memory_space<vmem>>, vector<64x32xbf16>
    %cst_27 = arith.constant dense<0.000000e+00> : vector<16x32xf32>
    %51 = tpu.matmul %49, %50, %cst_27 {dimension_numbers = #tpu.dot_dimension_numbers<[1], [0], [0], [1], [0, 0, 1, 1], [], []>} : vector<16x64xbf16>, vector<64x32xbf16>, vector<16x32xf32> -> vector<16x32xf32>
    %c0_28 = arith.constant 0 : index
    %c0_29 = arith.constant 0 : index
    %52 = vector.load %arg10[%c0_28, %c0_29] : memref<1x32xf32, #tpu.memory_space<vmem>>, vector<1x32xf32>
    %53 = vector.broadcast %52 : vector<1x32xf32> to vector<16x32xf32>
    %54 = arith.addf %51, %53 : vector<16x32xf32>
    %55 = arith.addf %54, %29 : vector<16x32xf32>
    %c0_30 = arith.constant 0 : index
    %c0_31 = arith.constant 0 : index
    %56 = vector.load %arg11[%c0_30, %c0_31] : memref<1x32xf32, #tpu.memory_space<vmem>>, vector<1x32xf32>
    %c0_32 = arith.constant 0 : index
    %c0_33 = arith.constant 0 : index
    %57 = vector.load %arg12[%c0_32, %c0_33] : memref<1x32xf32, #tpu.memory_space<vmem>>, vector<1x32xf32>
    %cst_34 = arith.constant dense<0.000000e+00> : vector<16xf32>
    %58 = vector.multi_reduction <add>, %55, %cst_34 [1] : vector<16x32xf32> to vector<16xf32>
    %59 = vector.shape_cast %58 : vector<16xf32> to vector<16x1xf32>
    %cst_35 = arith.constant 3.200000e+01 : f32
    %60 = vector.broadcast %cst_35 : f32 to vector<16x1xf32>
    %61 = arith.divf %59, %60 : vector<16x1xf32>
    %62 = vector.broadcast %61 : vector<16x1xf32> to vector<16x32xf32>
    %63 = arith.subf %55, %62 : vector<16x32xf32>
    %64 = arith.mulf %63, %63 : vector<16x32xf32>
    %cst_36 = arith.constant dense<0.000000e+00> : vector<16xf32>
    %65 = vector.multi_reduction <add>, %64, %cst_36 [1] : vector<16x32xf32> to vector<16xf32>
    %66 = vector.shape_cast %65 : vector<16xf32> to vector<16x1xf32>
    %cst_37 = arith.constant 3.200000e+01 : f32
    %67 = vector.broadcast %cst_37 : f32 to vector<16x1xf32>
    %68 = arith.divf %66, %67 : vector<16x1xf32>
    %cst_38 = arith.constant 9.99999996E-13 : f32
    %69 = vector.broadcast %cst_38 : f32 to vector<16x1xf32>
    %70 = arith.addf %68, %69 : vector<16x1xf32>
    %71 = math.rsqrt %70 : vector<16x1xf32>
    %72 = vector.broadcast %71 : vector<16x1xf32> to vector<16x32xf32>
    %73 = arith.mulf %63, %72 : vector<16x32xf32>
    %74 = vector.broadcast %56 : vector<1x32xf32> to vector<16x32xf32>
    %75 = arith.mulf %73, %74 : vector<16x32xf32>
    %76 = vector.broadcast %57 : vector<1x32xf32> to vector<16x32xf32>
    %77 = arith.addf %75, %76 : vector<16x32xf32>
    %c0_39 = arith.constant 0 : index
    %c0_40 = arith.constant 0 : index
    %78 = vector.load %arg13[%c0_39, %c0_40] : memref<16x32xf32, #tpu.memory_space<vmem>>, vector<16x32xf32>
    tpu.vector_store %arg13[%c0_39, %c0_40], %77 {strides = array<i32>} : memref<16x32xf32, #tpu.memory_space<vmem>>, vector<16x32xf32>,
    %79 = arith.truncf %77 : vector<16x32xf32> to vector<16x32xbf16>
    %c0_41 = arith.constant 0 : index
    %c0_42 = arith.constant 0 : index
    %80 = vector.load %arg14[%c0_41, %c0_42] : memref<16x32xbf16, #tpu.memory_space<vmem>>, vector<16x32xbf16>
    tpu.vector_store %arg14[%c0_41, %c0_42], %79 {strides = array<i32>} : memref<16x32xbf16, #tpu.memory_space<vmem>>, vector<16x32xbf16>,
    return
  }
  func.func @transform_0(%arg0: i32) -> (i32, i32) {
    %c0_i32 = arith.constant 0 : i32
    %c0_i32_0 = arith.constant 0 : i32
    return %arg0, %c0_i32 : i32, i32
  }
  func.func @transform_1(%arg0: i32) -> (i32, i32) {
    %c0_i32 = arith.constant 0 : i32
    %c0_i32_0 = arith.constant 0 : i32
    return %arg0, %c0_i32 : i32, i32
  }
  func.func @transform_2(%arg0: i32) -> (i32, i32) {
    %c0_i32 = arith.constant 0 : i32
    %c0_i32_0 = arith.constant 0 : i32
    %c0_i32_1 = arith.constant 0 : i32
    return %c0_i32, %c0_i32_0 : i32, i32
  }
  func.func @transform_3(%arg0: i32) -> (i32, i32) {
    %c0_i32 = arith.constant 0 : i32
    %c0_i32_0 = arith.constant 0 : i32
    %c0_i32_1 = arith.constant 0 : i32
    return %c0_i32, %c0_i32_0 : i32, i32
  }
  func.func @transform_4(%arg0: i32) -> (i32, i32) {
    %c0_i32 = arith.constant 0 : i32
    %c0_i32_0 = arith.constant 0 : i32
    %c0_i32_1 = arith.constant 0 : i32
    return %c0_i32, %c0_i32_0 : i32, i32
  }
  func.func @transform_5(%arg0: i32) -> (i32, i32) {
    %c0_i32 = arith.constant 0 : i32
    %c0_i32_0 = arith.constant 0 : i32
    %c0_i32_1 = arith.constant 0 : i32
    return %c0_i32, %c0_i32_0 : i32, i32
  }
  func.func @transform_6(%arg0: i32) -> (i32, i32) {
    %c0_i32 = arith.constant 0 : i32
    %c0_i32_0 = arith.constant 0 : i32
    %c0_i32_1 = arith.constant 0 : i32
    return %c0_i32, %c0_i32_0 : i32, i32
  }
  func.func @transform_7(%arg0: i32) -> (i32, i32) {
    %c0_i32 = arith.constant 0 : i32
    %c0_i32_0 = arith.constant 0 : i32
    %c0_i32_1 = arith.constant 0 : i32
    return %c0_i32, %c0_i32_0 : i32, i32
  }
  func.func @transform_8(%arg0: i32) -> (i32, i32) {
    %c0_i32 = arith.constant 0 : i32
    %c0_i32_0 = arith.constant 0 : i32
    %c0_i32_1 = arith.constant 0 : i32
    return %c0_i32, %c0_i32_0 : i32, i32
  }
  func.func @transform_9(%arg0: i32) -> (i32, i32) {
    %c0_i32 = arith.constant 0 : i32
    %c0_i32_0 = arith.constant 0 : i32
    %c0_i32_1 = arith.constant 0 : i32
    return %c0_i32, %c0_i32_0 : i32, i32
  }
  func.func @transform_10(%arg0: i32) -> (i32, i32) {
    %c0_i32 = arith.constant 0 : i32
    %c0_i32_0 = arith.constant 0 : i32
    %c0_i32_1 = arith.constant 0 : i32
    return %c0_i32, %c0_i32_0 : i32, i32
  }
  func.func @transform_11(%arg0: i32) -> (i32, i32) {
    %c0_i32 = arith.constant 0 : i32
    %c0_i32_0 = arith.constant 0 : i32
    %c0_i32_1 = arith.constant 0 : i32
    return %c0_i32, %c0_i32_0 : i32, i32
  }
  func.func @transform_12(%arg0: i32) -> (i32, i32) {
    %c0_i32 = arith.constant 0 : i32
    %c0_i32_0 = arith.constant 0 : i32
    return %arg0, %c0_i32 : i32, i32
  }
  func.func @transform_13(%arg0: i32) -> (i32, i32) {
    %c0_i32 = arith.constant 0 : i32
    %c0_i32_0 = arith.constant 0 : i32
    return %arg0, %c0_i32 : i32, i32
  }
}

module attributes {stable_mosaic.version = 11 : i64} {
  func.func @_ffn_chain_kernel(%arg0: i32, %arg1: memref<16x32xbf16, #tpu.memory_space<vmem>>, %arg2: memref<16x32xf32, #tpu.memory_space<vmem>>, %arg3: memref<32x32xbf16, #tpu.memory_space<vmem>>, %arg4: memref<1x32xf32, #tpu.memory_space<vmem>>, %arg5: memref<1x32xf32, #tpu.memory_space<vmem>>, %arg6: memref<1x32xf32, #tpu.memory_space<vmem>>, %arg7: memref<32x64xbf16, #tpu.memory_space<vmem>>, %arg8: memref<1x64xf32, #tpu.memory_space<vmem>>, %arg9: memref<64x32xbf16, #tpu.memory_space<vmem>>, %arg10: memref<1x32xf32, #tpu.memory_space<vmem>>, %arg11: memref<1x32xf32, #tpu.memory_space<vmem>>, %arg12: memref<1x32xf32, #tpu.memory_space<vmem>>, %arg13: memref<16x32xf32, #tpu.memory_space<vmem>>, %arg14: memref<16x32xbf16, #tpu.memory_space<vmem>>) attributes {dimension_semantics = [#tpu.dimension_semantics<parallel>], iteration_bounds = array<i64: 1>, scalar_prefetch = 0 : i64, scratch_operands = 0 : i64, tpu.core_type = #tpu.core_type<tc>, window_params = [{transform_indices = @transform_0, window_bounds = array<i64: 16, 32>}, {transform_indices = @transform_1, window_bounds = array<i64: 16, 32>}, {pipeline_mode = #tpu.pipeline_mode<synchronous>, transform_indices = @transform_2, window_bounds = array<i64: 32, 32>}, {pipeline_mode = #tpu.pipeline_mode<synchronous>, transform_indices = @transform_3, window_bounds = array<i64: 1, 32>}, {pipeline_mode = #tpu.pipeline_mode<synchronous>, transform_indices = @transform_4, window_bounds = array<i64: 1, 32>}, {pipeline_mode = #tpu.pipeline_mode<synchronous>, transform_indices = @transform_5, window_bounds = array<i64: 1, 32>}, {pipeline_mode = #tpu.pipeline_mode<synchronous>, transform_indices = @transform_6, window_bounds = array<i64: 32, 64>}, {pipeline_mode = #tpu.pipeline_mode<synchronous>, transform_indices = @transform_7, window_bounds = array<i64: 1, 64>}, {pipeline_mode = #tpu.pipeline_mode<synchronous>, transform_indices = @transform_8, window_bounds = array<i64: 64, 32>}, {pipeline_mode = #tpu.pipeline_mode<synchronous>, transform_indices = @transform_9, window_bounds = array<i64: 1, 32>}, {pipeline_mode = #tpu.pipeline_mode<synchronous>, transform_indices = @transform_10, window_bounds = array<i64: 1, 32>}, {pipeline_mode = #tpu.pipeline_mode<synchronous>, transform_indices = @transform_11, window_bounds = array<i64: 1, 32>}, {transform_indices = @transform_12, window_bounds = array<i64: 16, 32>}, {transform_indices = @transform_13, window_bounds = array<i64: 16, 32>}]} {
    %c0 = arith.constant 0 : index
    %c0_0 = arith.constant 0 : index
    %0 = vector.load %arg1[%c0, %c0_0] : memref<16x32xbf16, #tpu.memory_space<vmem>>, vector<16x32xbf16>
    %c0_1 = arith.constant 0 : index
    %c0_2 = arith.constant 0 : index
    %1 = vector.load %arg3[%c0_1, %c0_2] : memref<32x32xbf16, #tpu.memory_space<vmem>>, vector<32x32xbf16>
    %cst = arith.constant dense<0.000000e+00> : vector<16x32xf32>
    %2 = tpu.matmul %0, %1, %cst {dimension_numbers = #tpu.dot_dimension_numbers<[1], [0], [0], [1], [0, 0, 1, 1], [], []>} : vector<16x32xbf16>, vector<32x32xbf16>, vector<16x32xf32> -> vector<16x32xf32>
    %c0_3 = arith.constant 0 : index
    %c0_4 = arith.constant 0 : index
    %3 = vector.load %arg4[%c0_3, %c0_4] : memref<1x32xf32, #tpu.memory_space<vmem>>, vector<1x32xf32>
    %4 = vector.broadcast %3 : vector<1x32xf32> to vector<16x32xf32>
    %5 = arith.addf %2, %4 : vector<16x32xf32>
    %c0_5 = arith.constant 0 : index
    %c0_6 = arith.constant 0 : index
    %6 = vector.load %arg2[%c0_5, %c0_6] : memref<16x32xf32, #tpu.memory_space<vmem>>, vector<16x32xf32>
    %7 = arith.addf %5, %6 : vector<16x32xf32>
    %c0_7 = arith.constant 0 : index
    %c0_8 = arith.constant 0 : index
    %8 = vector.load %arg5[%c0_7, %c0_8] : memref<1x32xf32, #tpu.memory_space<vmem>>, vector<1x32xf32>
    %c0_9 = arith.constant 0 : index
    %c0_10 = arith.constant 0 : index
    %9 = vector.load %arg6[%c0_9, %c0_10] : memref<1x32xf32, #tpu.memory_space<vmem>>, vector<1x32xf32>
    %cst_11 = arith.constant dense<0.000000e+00> : vector<16xf32>
    %10 = vector.multi_reduction <add>, %7, %cst_11 [1] : vector<16x32xf32> to vector<16xf32>
    %11 = vector.shape_cast %10 : vector<16xf32> to vector<16x1xf32>
    %cst_12 = arith.constant 3.200000e+01 : f32
    %12 = vector.broadcast %cst_12 : f32 to vector<16x1xf32>
    %13 = arith.divf %11, %12 : vector<16x1xf32>
    %14 = vector.broadcast %13 : vector<16x1xf32> to vector<16x32xf32>
    %15 = arith.subf %7, %14 : vector<16x32xf32>
    %16 = arith.mulf %15, %15 : vector<16x32xf32>
    %cst_13 = arith.constant dense<0.000000e+00> : vector<16xf32>
    %17 = vector.multi_reduction <add>, %16, %cst_13 [1] : vector<16x32xf32> to vector<16xf32>
    %18 = vector.shape_cast %17 : vector<16xf32> to vector<16x1xf32>
    %cst_14 = arith.constant 3.200000e+01 : f32
    %19 = vector.broadcast %cst_14 : f32 to vector<16x1xf32>
    %20 = arith.divf %18, %19 : vector<16x1xf32>
    %cst_15 = arith.constant 9.99999996E-13 : f32
    %21 = vector.broadcast %cst_15 : f32 to vector<16x1xf32>
    %22 = arith.addf %20, %21 : vector<16x1xf32>
    %23 = math.rsqrt %22 : vector<16x1xf32>
    %24 = vector.broadcast %23 : vector<16x1xf32> to vector<16x32xf32>
    %25 = arith.mulf %15, %24 : vector<16x32xf32>
    %26 = vector.broadcast %8 : vector<1x32xf32> to vector<16x32xf32>
    %27 = arith.mulf %25, %26 : vector<16x32xf32>
    %28 = vector.broadcast %9 : vector<1x32xf32> to vector<16x32xf32>
    %29 = arith.addf %27, %28 : vector<16x32xf32>
    %30 = arith.truncf %29 : vector<16x32xf32> to vector<16x32xbf16>
    %c0_16 = arith.constant 0 : index
    %c0_17 = arith.constant 0 : index
    %31 = vector.load %arg7[%c0_16, %c0_17] : memref<32x64xbf16, #tpu.memory_space<vmem>>, vector<32x64xbf16>
    %cst_18 = arith.constant dense<0.000000e+00> : vector<16x64xf32>
    %32 = tpu.matmul %30, %31, %cst_18 {dimension_numbers = #tpu.dot_dimension_numbers<[1], [0], [0], [1], [0, 0, 1, 1], [], []>} : vector<16x32xbf16>, vector<32x64xbf16>, vector<16x64xf32> -> vector<16x64xf32>
    %c0_19 = arith.constant 0 : index
    %c0_20 = arith.constant 0 : index
    %33 = vector.load %arg8[%c0_19, %c0_20] : memref<1x64xf32, #tpu.memory_space<vmem>>, vector<1x64xf32>
    %34 = vector.broadcast %33 : vector<1x64xf32> to vector<16x64xf32>
    %35 = arith.addf %32, %34 : vector<16x64xf32>
    %cst_21 = arith.constant 5.000000e-01 : f32
    %36 = vector.broadcast %cst_21 : f32 to vector<16x64xf32>
    %37 = arith.mulf %36, %35 : vector<16x64xf32>
    %cst_22 = arith.constant 4.471500e-02 : f32
    %38 = vector.broadcast %cst_22 : f32 to vector<16x64xf32>
    %39 = arith.mulf %38, %35 : vector<16x64xf32>
    %40 = arith.mulf %39, %35 : vector<16x64xf32>
    %41 = arith.mulf %40, %35 : vector<16x64xf32>
    %42 = arith.addf %35, %41 : vector<16x64xf32>
    %cst_23 = arith.constant 0.797884583 : f32
    %43 = vector.broadcast %cst_23 : f32 to vector<16x64xf32>
    %44 = arith.mulf %43, %42 : vector<16x64xf32>
    %45 = math.tanh %44 : vector<16x64xf32>
    %cst_24 = arith.constant 1.000000e+00 : f32
    %46 = vector.broadcast %cst_24 : f32 to vector<16x64xf32>
    %47 = arith.addf %46, %45 : vector<16x64xf32>
    %48 = arith.mulf %37, %47 : vector<16x64xf32>
    %49 = arith.truncf %48 : vector<16x64xf32> to vector<16x64xbf16>
    %c0_25 = arith.constant 0 : index
    %c0_26 = arith.constant 0 : index
    %50 = vector.load %arg9[%c0_25, %c0_26] : memref<64x32xbf16, #tpu.memory_space<vmem>>, vector<64x32xbf16>
    %cst_27 = arith.constant dense<0.000000e+00> : vector<16x32xf32>
    %51 = tpu.matmul %49, %50, %cst_27 {dimension_numbers = #tpu.dot_dimension_numbers<[1], [0], [0], [1], [0, 0, 1, 1], [], []>} : vector<16x64xbf16>, vector<64x32xbf16>, vector<16x32xf32> -> vector<16x32xf32>
    %c0_28 = arith.constant 0 : index
    %c0_29 = arith.constant 0 : index
    %52 = vector.load %arg10[%c0_28, %c0_29] : memref<1x32xf32, #tpu.memory_space<vmem>>, vector<1x32xf32>
    %53 = vector.broadcast %52 : vector<1x32xf32> to vector<16x32xf32>
    %54 = arith.addf %51, %53 : vector<16x32xf32>
    %55 = arith.addf %54, %29 : vector<16x32xf32>
    %c0_30 = arith.constant 0 : index
    %c0_31 = arith.constant 0 : index
    %56 = vector.load %arg11[%c0_30, %c0_31] : memref<1x32xf32, #tpu.memory_space<vmem>>, vector<1x32xf32>
    %c0_32 = arith.constant 0 : index
    %c0_33 = arith.constant 0 : index
    %57 = vector.load %arg12[%c0_32, %c0_33] : memref<1x32xf32, #tpu.memory_space<vmem>>, vector<1x32xf32>
    %cst_34 = arith.constant dense<0.000000e+00> : vector<16xf32>
    %58 = vector.multi_reduction <add>, %55, %cst_34 [1] : vector<16x32xf32> to vector<16xf32>
    %59 = vector.shape_cast %58 : vector<16xf32> to vector<16x1xf32>
    %cst_35 = arith.constant 3.200000e+01 : f32
    %60 = vector.broadcast %cst_35 : f32 to vector<16x1xf32>
    %61 = arith.divf %59, %60 : vector<16x1xf32>
    %62 = vector.broadcast %61 : vector<16x1xf32> to vector<16x32xf32>
    %63 = arith.subf %55, %62 : vector<16x32xf32>
    %64 = arith.mulf %63, %63 : vector<16x32xf32>
    %cst_36 = arith.constant dense<0.000000e+00> : vector<16xf32>
    %65 = vector.multi_reduction <add>, %64, %cst_36 [1] : vector<16x32xf32> to vector<16xf32>
    %66 = vector.shape_cast %65 : vector<16xf32> to vector<16x1xf32>
    %cst_37 = arith.constant 3.200000e+01 : f32
    %67 = vector.broadcast %cst_37 : f32 to vector<16x1xf32>
    %68 = arith.divf %66, %67 : vector<16x1xf32>
    %cst_38 = arith.constant 9.99999996E-13 : f32
    %69 = vector.broadcast %cst_38 : f32 to vector<16x1xf32>
    %70 = arith.addf %68, %69 : vector<16x1xf32>
    %71 = math.rsqrt %70 : vector<16x1xf32>
    %72 = vector.broadcast %71 : vector<16x1xf32> to vector<16x32xf32>
    %73 = arith.mulf %63, %72 : vector<16x32xf32>
    %74 = vector.broadcast %56 : vector<1x32xf32> to vector<16x32xf32>
    %75 = arith.mulf %73, %74 : vector<16x32xf32>
    %76 = vector.broadcast %57 : vector<1x32xf32> to vector<16x32xf32>
    %77 = arith.addf %75, %76 : vector<16x32xf32>
    %c0_39 = arith.constant 0 : index
    %c0_40 = arith.constant 0 : index
    %78 = vector.load %arg13[%c0_39, %c0_40] : memref<16x32xf32, #tpu.memory_space<vmem>>, vector<16x32xf32>
    tpu.vector_store %arg13[%c0_39, %c0_40], %77 {strides = array<i32>} : memref<16x32xf32, #tpu.memory_space<vmem>>, vector<16x32xf32>,
    %79 = arith.truncf %77 : vector<16x32xf32> to vector<16x32xbf16>
    %c0_41 = arith.constant 0 : index
    %c0_42 = arith.constant 0 : index
    %80 = vector.load %arg14[%c0_41, %c0_42] : memref<16x32xbf16, #tpu.memory_space<vmem>>, vector<16x32xbf16>
    tpu.vector_store %arg14[%c0_41, %c0_42], %79 {strides = array<i32>} : memref<16x32xbf16, #tpu.memory_space<vmem>>, vector<16x32xbf16>,
    return
  }
  func.func @transform_0(%arg0: i32) -> (i32, i32) {
    %c0_i32 = arith.constant 0 : i32
    %c0_i32_0 = arith.constant 0 : i32
    return %arg0, %c0_i32 : i32, i32
  }
  func.func @transform_1(%arg0: i32) -> (i32, i32) {
    %c0_i32 = arith.constant 0 : i32
    %c0_i32_0 = arith.constant 0 : i32
    return %arg0, %c0_i32 : i32, i32
  }
  func.func @transform_2(%arg0: i32) -> (i32, i32) {
    %c0_i32 = arith.constant 0 : i32
    %c0_i32_0 = arith.constant 0 : i32
    %c0_i32_1 = arith.constant 0 : i32
    return %c0_i32, %c0_i32_0 : i32, i32
  }
  func.func @transform_3(%arg0: i32) -> (i32, i32) {
    %c0_i32 = arith.constant 0 : i32
    %c0_i32_0 = arith.constant 0 : i32
    %c0_i32_1 = arith.constant 0 : i32
    return %c0_i32, %c0_i32_0 : i32, i32
  }
  func.func @transform_4(%arg0: i32) -> (i32, i32) {
    %c0_i32 = arith.constant 0 : i32
    %c0_i32_0 = arith.constant 0 : i32
    %c0_i32_1 = arith.constant 0 : i32
    return %c0_i32, %c0_i32_0 : i32, i32
  }
  func.func @transform_5(%arg0: i32) -> (i32, i32) {
    %c0_i32 = arith.constant 0 : i32
    %c0_i32_0 = arith.constant 0 : i32
    %c0_i32_1 = arith.constant 0 : i32
    return %c0_i32, %c0_i32_0 : i32, i32
  }
  func.func @transform_6(%arg0: i32) -> (i32, i32) {
    %c0_i32 = arith.constant 0 : i32
    %c0_i32_0 = arith.constant 0 : i32
    %c0_i32_1 = arith.constant 0 : i32
    return %c0_i32, %c0_i32_0 : i32, i32
  }
  func.func @transform_7(%arg0: i32) -> (i32, i32) {
    %c0_i32 = arith.constant 0 : i32
    %c0_i32_0 = arith.constant 0 : i32
    %c0_i32_1 = arith.constant 0 : i32
    return %c0_i32, %c0_i32_0 : i32, i32
  }
  func.func @transform_8(%arg0: i32) -> (i32, i32) {
    %c0_i32 = arith.constant 0 : i32
    %c0_i32_0 = arith.constant 0 : i32
    %c0_i32_1 = arith.constant 0 : i32
    return %c0_i32, %c0_i32_0 : i32, i32
  }
  func.func @transform_9(%arg0: i32) -> (i32, i32) {
    %c0_i32 = arith.constant 0 : i32
    %c0_i32_0 = arith.constant 0 : i32
    %c0_i32_1 = arith.constant 0 : i32
    return %c0_i32, %c0_i32_0 : i32, i32
  }
  func.func @transform_10(%arg0: i32) -> (i32, i32) {
    %c0_i32 = arith.constant 0 : i32
    %c0_i32_0 = arith.constant 0 : i32
    %c0_i32_1 = arith.constant 0 : i32
    return %c0_i32, %c0_i32_0 : i32, i32
  }
  func.func @transform_11(%arg0: i32) -> (i32, i32) {
    %c0_i32 = arith.constant 0 : i32
    %c0_i32_0 = arith.constant 0 : i32
    %c0_i32_1 = arith.constant 0 : i32
    return %c0_i32, %c0_i32_0 : i32, i32
  }
  func.func @transform_12(%arg0: i32) -> (i32, i32) {
    %c0_i32 = arith.constant 0 : i32
    %c0_i32_0 = arith.constant 0 : i32
    return %arg0, %c0_i32 : i32, i32
  }
  func.func @transform_13(%arg0: i32) -> (i32, i32) {
    %c0_i32 = arith.constant 0 : i32
    %c0_i32_0 = arith.constant 0 : i32
    return %arg0, %c0_i32 : i32, i32
  }
}

</mosaic_0001>

<llo_original>
// kernel: bert_encoder_forward.6
$region0: #{bert_encoder_forward.6}
  #allocation0 [shape = 'u32[]', space=smem, size = 0x4, offset = 0x4, fixed_abs, tag = 'smem constant byte address 0x4 - core index']
  #allocation1 [shape = 'u32[144,128]{1,0:T(1,128)}', space=vmem, size = 0x12000, scoped, tag = 'internal scratch']
  %s0 = inlined_call_operand.vmem [shape: bf16[16,32], index: 0, kind: input, shape index: {}]
  %s1 = inlined_call_operand.vmem [shape: bf16[32,96], index: 1, kind: input, shape index: {}]
  %s2 = inlined_call_operand.vmem [shape: f32[1,96], index: 2, kind: input, shape index: {}]
  %s3 = inlined_call_operand.vmem [shape: bf16[16,32], index: 3, kind: output, shape index: {0}]
  %s4 = inlined_call_operand.vmem [shape: bf16[16,32], index: 4, kind: output, shape index: {1}]
  %s5 = inlined_call_operand.vmem [shape: bf16[16,32], index: 5, kind: output, shape index: {2}]
  %6 = xla_tuple %s3, %s4, %s5
  %s7 = sld [smem:[#allocation0]]
  $region38: #{bert_encoder_forward.6} parent=0
    _
  %s9 = ssub.s32 1, %s7
  %s10 = scalar_select 0, %s9, %s7
  // Predicated region
  $region2: #{bert_encoder_forward.6} parent=0 // pred_check
    _
  $region3: #{bert_encoder_forward.6} parent=0 // pred_check_branch
    %12 = sbr.rel (0) target = $region5
  $region4: #{bert_encoder_forward.6} parent=0 // pred_region
    _
  $region5: #{bert_encoder_forward.6} parent=0 // pred_fallthru
    _
  // Predicated region
  $region6: #{bert_encoder_forward.6} parent=0 // pred_check
    _
  $region7: #{bert_encoder_forward.6} parent=0 // pred_check_branch
    %14 = sbr.rel (0) target = $region9
  $region8: #{bert_encoder_forward.6} parent=0 // pred_region
    _
  $region9: #{bert_encoder_forward.6} parent=0 // pred_fallthru
    _
  // Predicated region
  $region10: #{bert_encoder_forward.6} parent=0 // pred_check
    _
  $region11: #{bert_encoder_forward.6} parent=0 // pred_check_branch
    %16 = sbr.rel (0) target = $region13
  $region12: #{bert_encoder_forward.6} parent=0 // pred_region
    _
  $region13: #{bert_encoder_forward.6} parent=0 // pred_fallthru
    _
  %v18 = vld [vmem:[%s0] sm:$0xf]
  %v19 = vld [vmem:[%s0 + $0x4] sm:$0xf]
  %v20 = vld [vmem:[%s1] sm:$0xf]
  %v21 = vld [vmem:[%s1 + $0x4] sm:$0xf]
  %v22 = vld [vmem:[%s1 + $0x8] sm:$0xf]
  %v23 = vld [vmem:[%s1 + $0xc] sm:$0xf]
  %v24 = vld [vmem:[%s2] sm:$0x1]
  %v26 = vlaneseq
  %v27 = vshrl.u32 %v26, 7
  %v28 = vsub.s32 0, %v27
  %v29 = vrot.slane %v24, %v28
  %v33 = vunpack.c.l.b16 %v18
  %v34 = vunpack.c.l.b16 %v19
  %v35 = vpack.c.b16 %v34, %v33
  %v40 = vunpack.c.l.b16 %v20
  %v41 = vunpack.c.l.b16 %v21
  %v42 = vunpack.c.l.b16 %v22
  %v43 = vunpack.c.l.b16 %v23
  %v44 = vpack.c.b16 %v41, %v40
  %v45 = vpack.c.b16 %v43, %v42
  %vm48 = vcmask 261120
  %v50 = vsel %vm48, %v35, 0
  %52 = vmatprep.subr.bf16.mxu0 0
  %53 = vmatpush1.bf16.msra.mxu0 %v44
  %54 = vmatprep.subr.bf16.mxu0 0
  %55 = vmatpush1.bf16.msra.mxu0 %v45
  %56 = vmatprep.subr.bf16.mxu0 0
  %57 = vmatpush1.bf16.msra.mxu0 0
  %58 = vmatprep.subr.bf16.mxu0 0
  %59 = vmatpush1.bf16.msra.mxu0 0
  %60 = vmatprep.subr.bf16.mxu0 0
  %61 = vmatpush1.bf16.msra.mxu0 0
  %62 = vmatprep.subr.bf16.mxu0 0
  %63 = vmatpush1.bf16.msra.mxu0 0
  %64 = vmatprep.subr.bf16.mxu0 0
  %65 = vmatpush1.bf16.msra.mxu0 0
  %66 = vmatprep.subr.bf16.mxu0 0
  %67 = vmatpush1.bf16.msra.mxu0 0
  %68 = vmatprep.subr.bf16.mxu0 0
  %69 = vmatpush1.bf16.msra.mxu0 0
  %70 = vmatprep.subr.bf16.mxu0 0
  %71 = vmatpush1.bf16.msra.mxu0 0
  %72 = vmatprep.subr.bf16.mxu0 0
  %73 = vmatpush1.bf16.msra.mxu0 0
  %74 = vmatprep.subr.bf16.mxu0 0
  %75 = vmatpush1.bf16.msra.mxu0 0
  %76 = vmatprep.subr.bf16.mxu0 0
  %77 = vmatpush1.bf16.msra.mxu0 0
  %78 = vmatprep.subr.bf16.mxu0 0
  %79 = vmatpush1.bf16.msra.mxu0 0
  %80 = vmatprep.subr.bf16.mxu0 0
  %81 = vmatpush1.bf16.msra.mxu0 0
  %82 = vmatprep.subr.bf16.mxu0 0
  %83 = vmatpush1.bf16.msra.mxu0 0
  %84 = vmatprep.mubr.bf16.mxu0 0
  %85 = vmatmul.mubr.bf16.gmra.mrb[0].mxu0 %v50
  %v86 = vpop.f32.mrb[0].mxu0
  %v87 = vadd.f32 %v29, %v86
  %v88 = vpop.f32.mrb[0].mxu0
  %v89 = vpop.f32.mrb[0].mxu0
  %v90 = vadd.f32 %v29, %v89
  %v91 = vpop.f32.mrb[0].mxu0
  %92 = vdwg.mxu0
  %v93 = vpack.c.bf16 %v90, %v87
  %v95 = vunpack.c.l.b16 %v93
  %v96 = vunpack.c.h.b16 %v93
  %v97 = vpack.c.b16 %v95, %v95
  %v98 = vpack.c.b16 %v96, %v96
  %vm101 = vcmask 257024
  %102 = vst.msk [vmem:[%s3] sm:$0xf] %vm101, %v97
  %103 = vst.msk [vmem:[%s3 + $0x4] sm:$0xf] %vm101, %v98
  %104 = vrot.lane.b32.xlu0 %v97, 96
  %v105 = vpop.permute.xlu0 %104
  %106 = vrot.lane.b32.xlu0 %v98, 96
  %v107 = vpop.permute.xlu0 %106
  %110 = vst.msk [vmem:[%s4] sm:$0xf] %vm101, %v105
  %111 = vst.msk [vmem:[%s4 + $0x4] sm:$0xf] %vm101, %v107
  %112 = vrot.lane.b32.xlu0 %v97, 64
  %v113 = vpop.permute.xlu0 %112
  %114 = vrot.lane.b32.xlu0 %v98, 64
  %v115 = vpop.permute.xlu0 %114
  %118 = vst.msk [vmem:[%s5] sm:$0xf] %vm101, %v113
  %119 = vst.msk [vmem:[%s5 + $0x4] sm:$0xf] %vm101, %v115
  // Predicated region
  $region14: #{bert_encoder_forward.6} parent=0 // pred_check
    _
  $region15: #{bert_encoder_forward.6} parent=0 // pred_check_branch
    %121 = sbr.rel (0) target = $region17
  $region16: #{bert_encoder_forward.6} parent=0 // pred_region
    _
  $region17: #{bert_encoder_forward.6} parent=0 // pred_fallthru
    _
  // Predicated region
  $region18: #{bert_encoder_forward.6} parent=0 // pred_check
    _
  $region19: #{bert_encoder_forward.6} parent=0 // pred_check_branch
    %123 = sbr.rel (0) target = $region21
  $region20: #{bert_encoder_forward.6} parent=0 // pred_region
    _
  $region21: #{bert_encoder_forward.6} parent=0 // pred_fallthru
    _
  // Predicated region
  $region22: #{bert_encoder_forward.6} parent=0 // pred_check
    _
  $region23: #{bert_encoder_forward.6} parent=0 // pred_check_branch
    %125 = sbr.rel (0) target = $region25
  $region24: #{bert_encoder_forward.6} parent=0 // pred_region
    _
  $region25: #{bert_encoder_forward.6} parent=0 // pred_fallthru
    _
  // Predicated region
  $region26: #{bert_encoder_forward.6} parent=0 // pred_check
    _
  $region27: #{bert_encoder_forward.6} parent=0 // pred_check_branch
    %127 = sbr.rel (0) target = $region29
  $region28: #{bert_encoder_forward.6} parent=0 // pred_region
    _
  $region29: #{bert_encoder_forward.6} parent=0 // pred_fallthru
    _
  // Predicated region
  $region30: #{bert_encoder_forward.6} parent=0 // pred_check
    _
  $region31: #{bert_encoder_forward.6} parent=0 // pred_check_branch
    %129 = sbr.rel (0) target = $region33
  $region32: #{bert_encoder_forward.6} parent=0 // pred_region
    _
  $region33: #{bert_encoder_forward.6} parent=0 // pred_fallthru
    _
  // Predicated region
  $region34: #{bert_encoder_forward.6} parent=0 // pred_check
    _
  $region35: #{bert_encoder_forward.6} parent=0 // pred_check_branch
    %131 = sbr.rel (0) target = $region37
  $region36: #{bert_encoder_forward.6} parent=0 // pred_region
    _
  $region37: #{bert_encoder_forward.6} parent=0 // pred_fallthru
    _

// kernel: bert_encoder_forward.11
$region0: #{bert_encoder_forward.11}
  #allocation0 [shape = 'u32[]', space=smem, size = 0x4, offset = 0x4, fixed_abs, tag = 'smem constant byte address 0x4 - core index']
  #allocation1 [shape = 'u32[144,128]{1,0:T(1,128)}', space=vmem, size = 0x12000, scoped, tag = 'internal scratch']
  %s0 = inlined_call_operand.vmem [shape: bf16[16,32], index: 0, kind: input, shape index: {}]
  %s1 = inlined_call_operand.vmem [shape: f32[16,32], index: 1, kind: input, shape index: {}]
  %s2 = inlined_call_operand.vmem [shape: bf16[32,32], index: 2, kind: input, shape index: {}]
  %s3 = inlined_call_operand.vmem [shape: f32[1,32], index: 3, kind: input, shape index: {}]
  %s4 = inlined_call_operand.vmem [shape: f32[1,32], index: 4, kind: input, shape index: {}]
  %s5 = inlined_call_operand.vmem [shape: f32[1,32], index: 5, kind: input, shape index: {}]
  %s6 = inlined_call_operand.vmem [shape: bf16[32,64], index: 6, kind: input, shape index: {}]
  %s7 = inlined_call_operand.vmem [shape: f32[1,64], index: 7, kind: input, shape index: {}]
  %s8 = inlined_call_operand.vmem [shape: bf16[64,32], index: 8, kind: input, shape index: {}]
  %s9 = inlined_call_operand.vmem [shape: f32[1,32], index: 9, kind: input, shape index: {}]
  %s10 = inlined_call_operand.vmem [shape: f32[1,32], index: 10, kind: input, shape index: {}]
  %s11 = inlined_call_operand.vmem [shape: f32[1,32], index: 11, kind: input, shape index: {}]
  %s12 = inlined_call_operand.hbm [shape: f32[16,32], index: 12, kind: output, shape index: {0}]
  %s13 = inlined_call_operand.hbm [shape: bf16[16,32], index: 13, kind: output, shape index: {1}]
  %14 = xla_tuple %s12, %s13
  %s15 = sld [smem:[#allocation0]]
  $region66: #{bert_encoder_forward.11} parent=0
    _
  %s17 = ssub.s32 1, %s15
  %s18 = scalar_select 0, %s17, %s15
  $region1: #{bert_encoder_forward.11} parent=0
    #allocation2 [shape = 'u8[8192]{0}', space=vmem, size = 0x2000, scoped, tag = 'output window, operand 0, single buffered']
    #allocation3 [shape = 's32[1]{0}', space=sflag, size = 0x4, scoped, tag = 'scoped memory for bert_encoder_forward.11']
    #allocation4 [shape = 'u8[4096]{0}', space=vmem, size = 0x1000, scoped, tag = 'output window, operand 1, single buffered']
    #allocation5 [shape = 's32[1]{0}', space=sflag, size = 0x4, scoped, tag = 'scoped memory for bert_encoder_forward.11']
    %19 = vsyncpa [#allocation3], 0
    %20 = vsyncpa [#allocation5], 0
    // Predicated region
    $region2: #{bert_encoder_forward.11} parent=1 // pred_check
      _
    $region3: #{bert_encoder_forward.11} parent=1 // pred_check_branch
      %22 = sbr.rel (0) target = $region5
    $region4: #{bert_encoder_forward.11} parent=1 // pred_region
      _
    $region5: #{bert_encoder_forward.11} parent=1 // pred_fallthru
      _
    // Predicated region
    $region6: #{bert_encoder_forward.11} parent=1 // pred_check
      _
    $region7: #{bert_encoder_forward.11} parent=1 // pred_check_branch
      %24 = sbr.rel (0) target = $region9
    $region8: #{bert_encoder_forward.11} parent=1 // pred_region
      _
    $region9: #{bert_encoder_forward.11} parent=1 // pred_fallthru
      _
    // Predicated region
    $region10: #{bert_encoder_forward.11} parent=1 // pred_check
      _
    $region11: #{bert_encoder_forward.11} parent=1 // pred_check_branch
      %26 = sbr.rel (0) target = $region13
    $region12: #{bert_encoder_forward.11} parent=1 // pred_region
      _
    $region13: #{bert_encoder_forward.11} parent=1 // pred_fallthru
      _
    // Predicated region
    $region14: #{bert_encoder_forward.11} parent=1 // pred_check
      _
    $region15: #{bert_encoder_forward.11} parent=1 // pred_check_branch
      %28 = sbr.rel (0) target = $region17
    $region16: #{bert_encoder_forward.11} parent=1 // pred_region
      _
    $region17: #{bert_encoder_forward.11} parent=1 // pred_fallthru
      _
    // Predicated region
    $region18: #{bert_encoder_forward.11} parent=1 // pred_check
      _
    $region19: #{bert_encoder_forward.11} parent=1 // pred_check_branch
      %30 = sbr.rel (0) target = $region21
    $region20: #{bert_encoder_forward.11} parent=1 // pred_region
      _
    $region21: #{bert_encoder_forward.11} parent=1 // pred_fallthru
      _
    // Predicated region
    $region22: #{bert_encoder_forward.11} parent=1 // pred_check
      _
    $region23: #{bert_encoder_forward.11} parent=1 // pred_check_branch
      %32 = sbr.rel (0) target = $region25
    $region24: #{bert_encoder_forward.11} parent=1 // pred_region
      _
    $region25: #{bert_encoder_forward.11} parent=1 // pred_fallthru
      _
    // Predicated region
    $region26: #{bert_encoder_forward.11} parent=1 // pred_check
      _
    $region27: #{bert_encoder_forward.11} parent=1 // pred_check_branch
      %34 = sbr.rel (0) target = $region29
    $region28: #{bert_encoder_forward.11} parent=1 // pred_region
      _
    $region29: #{bert_encoder_forward.11} parent=1 // pred_fallthru
      _
    // Predicated region
    $region30: #{bert_encoder_forward.11} parent=1 // pred_check
      _
    $region31: #{bert_encoder_forward.11} parent=1 // pred_check_branch
      %36 = sbr.rel (0) target = $region33
    $region32: #{bert_encoder_forward.11} parent=1 // pred_region
      _
    $region33: #{bert_encoder_forward.11} parent=1 // pred_fallthru
      _
    // Predicated region
    $region34: #{bert_encoder_forward.11} parent=1 // pred_check
      _
    $region35: #{bert_encoder_forward.11} parent=1 // pred_check_branch
      %38 = sbr.rel (0) target = $region37
    $region36: #{bert_encoder_forward.11} parent=1 // pred_region
      _
    $region37: #{bert_encoder_forward.11} parent=1 // pred_fallthru
      _
    // Predicated region
    $region38: #{bert_encoder_forward.11} parent=1 // pred_check
      _
    $region39: #{bert_encoder_forward.11} parent=1 // pred_check_branch
      %40 = sbr.rel (0) target = $region41
    $region40: #{bert_encoder_forward.11} parent=1 // pred_region
      _
    $region41: #{bert_encoder_forward.11} parent=1 // pred_fallthru
      _
    // Predicated region
    $region42: #{bert_encoder_forward.11} parent=1 // pred_check
      _
    $region43: #{bert_encoder_forward.11} parent=1 // pred_check_branch
      %42 = sbr.rel (0) target = $region45
    $region44: #{bert_encoder_forward.11} parent=1 // pred_region
      _
    $region45: #{bert_encoder_forward.11} parent=1 // pred_fallthru
      _
    // Predicated region
    $region46: #{bert_encoder_forward.11} parent=1 // pred_check
      _
    $region47: #{bert_encoder_forward.11} parent=1 // pred_check_branch
      %44 = sbr.rel (0) target = $region49
    $region48: #{bert_encoder_forward.11} parent=1 // pred_region
      _
    $region49: #{bert_encoder_forward.11} parent=1 // pred_fallthru
      _
    %v46 = vld [vmem:[%s0] sm:$0xf]
    %v47 = vld [vmem:[%s0 + $0x4] sm:$0xf]
    %v48 = vld [vmem:[%s2] sm:$0xf]
    %v49 = vld [vmem:[%s2 + $0x4] sm:$0xf]
    %v50 = vld [vmem:[%s2 + $0x8] sm:$0xf]
    %v51 = vld [vmem:[%s2 + $0xc] sm:$0xf]
    %v52 = vld [vmem:[%s3] sm:$0x1]
    %v54 = vlaneseq
    %v55 = vshrl.u32 %v54, 7
    %v56 = vsub.s32 0, %v55
    %v57 = vrot.slane %v52, %v56
    %v61 = vunpack.c.l.b16 %v46
    %v62 = vunpack.c.l.b16 %v47
    %v63 = vpack.c.b16 %v62, %v61
    %v68 = vunpack.c.l.b16 %v48
    %v69 = vunpack.c.l.b16 %v49
    %v70 = vunpack.c.l.b16 %v50
    %v71 = vunpack.c.l.b16 %v51
    %v72 = vpack.c.b16 %v69, %v68
    %v73 = vpack.c.b16 %v71, %v70
    %vm76 = vcmask 261120
    %v78 = vsel %vm76, %v63, 0
    %80 = vmatprep.subr.bf16.mxu0 0
    %81 = vmatpush1.bf16.msra.mxu0 %v72
    %82 = vmatprep.subr.bf16.mxu0 0
    %83 = vmatpush1.bf16.msra.mxu0 %v73
    %84 = vmatprep.subr.bf16.mxu0 0
    %85 = vmatpush1.bf16.msra.mxu0 0
    %86 = vmatprep.subr.bf16.mxu0 0
    %87 = vmatpush1.bf16.msra.mxu0 0
    %88 = vmatprep.subr.bf16.mxu0 0
    %89 = vmatpush1.bf16.msra.mxu0 0
    %90 = vmatprep.subr.bf16.mxu0 0
    %91 = vmatpush1.bf16.msra.mxu0 0
    %92 = vmatprep.subr.bf16.mxu0 0
    %93 = vmatpush1.bf16.msra.mxu0 0
    %94 = vmatprep.subr.bf16.mxu0 0
    %95 = vmatpush1.bf16.msra.mxu0 0
    %96 = vmatprep.subr.bf16.mxu0 0
    %97 = vmatpush1.bf16.msra.mxu0 0
    %98 = vmatprep.subr.bf16.mxu0 0
    %99 = vmatpush1.bf16.msra.mxu0 0
    %100 = vmatprep.subr.bf16.mxu0 0
    %101 = vmatpush1.bf16.msra.mxu0 0
    %102 = vmatprep.subr.bf16.mxu0 0
    %103 = vmatpush1.bf16.msra.mxu0 0
    %104 = vmatprep.subr.bf16.mxu0 0
    %105 = vmatpush1.bf16.msra.mxu0 0
    %106 = vmatprep.subr.bf16.mxu0 0
    %107 = vmatpush1.bf16.msra.mxu0 0
    %108 = vmatprep.subr.bf16.mxu0 0
    %109 = vmatpush1.bf16.msra.mxu0 0
    %110 = vmatprep.subr.bf16.mxu0 0
    %111 = vmatpush1.bf16.msra.mxu0 0
    %112 = vmatprep.mubr.bf16.mxu0 0
    %113 = vmatmul.mubr.bf16.gmra.mrb[0].mxu0 %v78
    %v114 = vpop.f32.mrb[0].mxu0
    %v115 = vadd.f32 %v57, %v114
    %v116 = vpop.f32.mrb[0].mxu0
    %v117 = vpop.f32.mrb[0].mxu0
    %v118 = vadd.f32 %v57, %v117
    %v119 = vpop.f32.mrb[0].mxu0
    %120 = vdwg.mxu0
    %v121 = vld [vmem:[%s1] sm:$0xff]
    %v122 = vld [vmem:[%s1 + $0x8] sm:$0xff]
    %v123 = vadd.f32 %v115, %v121
    %v124 = vadd.f32 %v118, %v122
    %v125 = vld [vmem:[%s4] sm:$0x1]
    %v126 = vld [vmem:[%s5] sm:$0x1]
    %v127 = vsel %vm76, %v123, 0.0
    %128 = vadd.xlane.f32.xlu0 %v127
    %v129 = vpop.xlane.xlu0 %128
    %v130 = vsel %vm76, %v124, 0.0
    %131 = vadd.xlane.f32.xlu0 %v130
    %v132 = vpop.xlane.xlu0 %131
    %v133 = vrcp.pop 32.0
    %v134 = vmul.f32 %v129, %v133
    %v135 = vmul.f32 %v132, %v133
    %v136 = vsub.f32 %v123, %v134
    %v137 = vsub.f32 %v124, %v135
    %v138 = vmul.f32 %v136, %v136
    %v139 = vmul.f32 %v137, %v137
    %v140 = vsel %vm76, %v138, 0.0
    %141 = vadd.xlane.f32.xlu0 %v140
    %v142 = vpop.xlane.xlu0 %141
    %v143 = vsel %vm76, %v139, 0.0
    %144 = vadd.xlane.f32.xlu0 %v143
    %v145 = vpop.xlane.xlu0 %144
    %v146 = vmul.f32 %v142, %v133
    %v147 = vmul.f32 %v145, %v133
    %v148 = vadd.f32 %v146, 1e-12
    %v149 = vadd.f32 %v147, 1e-12
    %v150 = vrsqrt.pop %v148
    %v151 = vrsqrt.pop %v149
    %v152 = vmul.f32 %v136, %v150
    %v153 = vmul.f32 %v137, %v151
    %v155 = vlaneseq
    %v156 = vshrl.u32 %v155, 7
    %v157 = vsub.s32 0, %v156
    %v158 = vrot.slane %v125, %v157
    %v160 = vmul.f32 %v152, %v158
    %v161 = vmul.f32 %v153, %v158
    %v163 = vlaneseq
    %v164 = vshrl.u32 %v163, 7
    %v165 = vsub.s32 0, %v164
    %v166 = vrot.slane %v126, %v165
    %v168 = vadd.f32 %v160, %v166
    %v169 = vadd.f32 %v161, %v166
    %v170 = vpack.c.bf16 %v169, %v168
    %v171 = vld [vmem:[%s6] sm:$0xf]
    %v172 = vld [vmem:[%s6 + $0x4] sm:$0xf]
    %v173 = vld [vmem:[%s6 + $0x8] sm:$0xf]
    %v174 = vld [vmem:[%s6 + $0xc] sm:$0xf]
    %v175 = vld [vmem:[%s7] sm:$0x1]
    %v177 = vlaneseq
    %v178 = vshrl.u32 %v177, 7
    %v179 = vsub.s32 0, %v178
    %v180 = vrot.slane %v175, %v179
    %v186 = vunpack.c.l.b16 %v171
    %v187 = vunpack.c.l.b16 %v172
    %v188 = vunpack.c.l.b16 %v173
    %v189 = vunpack.c.l.b16 %v174
    %v190 = vpack.c.b16 %v187, %v186
    %v191 = vpack.c.b16 %v189, %v188
    %v195 = vsel %vm76, %v170, 0
    %197 = vmatprep.subr.bf16.mxu0 0
    %198 = vmatpush1.bf16.msra.mxu0 %v190
    %199 = vmatprep.subr.bf16.mxu0 0
    %200 = vmatpush1.bf16.msra.mxu0 %v191
    %201 = vmatprep.subr.bf16.mxu0 0
    %202 = vmatpush1.bf16.msra.mxu0 0
    %203 = vmatprep.subr.bf16.mxu0 0
    %204 = vmatpush1.bf16.msra.mxu0 0
    %205 = vmatprep.subr.bf16.mxu0 0
    %206 = vmatpush1.bf16.msra.mxu0 0
    %207 = vmatprep.subr.bf16.mxu0 0
    %208 = vmatpush1.bf16.msra.mxu0 0
    %209 = vmatprep.subr.bf16.mxu0 0
    %210 = vmatpush1.bf16.msra.mxu0 0
    %211 = vmatprep.subr.bf16.mxu0 0
    %212 = vmatpush1.bf16.msra.mxu0 0
    %213 = vmatprep.subr.bf16.mxu0 0
    %214 = vmatpush1.bf16.msra.mxu0 0
    %215 = vmatprep.subr.bf16.mxu0 0
    %216 = vmatpush1.bf16.msra.mxu0 0
    %217 = vmatprep.subr.bf16.mxu0 0
    %218 = vmatpush1.bf16.msra.mxu0 0
    %219 = vmatprep.subr.bf16.mxu0 0
    %220 = vmatpush1.bf16.msra.mxu0 0
    %221 = vmatprep.subr.bf16.mxu0 0
    %222 = vmatpush1.bf16.msra.mxu0 0
    %223 = vmatprep.subr.bf16.mxu0 0
    %224 = vmatpush1.bf16.msra.mxu0 0
    %225 = vmatprep.subr.bf16.mxu0 0
    %226 = vmatpush1.bf16.msra.mxu0 0
    %227 = vmatprep.subr.bf16.mxu0 0
    %228 = vmatpush1.bf16.msra.mxu0 0
    %229 = vmatprep.mubr.bf16.mxu0 0
    %230 = vmatmul.mubr.bf16.gmra.mrb[0].mxu0 %v195
    %v231 = vpop.f32.mrb[0].mxu0
    %v232 = vadd.f32 %v180, %v231
    %v233 = vpop.f32.mrb[0].mxu0
    %v234 = vpop.f32.mrb[0].mxu0
    %v235 = vadd.f32 %v180, %v234
    %v236 = vpop.f32.mrb[0].mxu0
    %237 = vdwg.mxu0
    %v238 = vmul.f32 %v232, 0.5
    %v239 = vmul.f32 %v235, 0.5
    %v240 = vmul.f32 %v232, 0.044715
    %v241 = vmul.f32 %v235, 0.044715
    %v242 = vmul.f32 %v240, %v232
    %v243 = vmul.f32 %v241, %v235
    %v244 = vmul.f32 %v242, %v232
    %v245 = vmul.f32 %v243, %v235
    %v246 = vadd.f32 %v232, %v244
    %v247 = vadd.f32 %v235, %v245
    %v248 = vmul.f32 %v246, 0.7978846
    %v249 = vmul.f32 %v247, 0.7978846
    %v250 = vtanh.pop %v248
    %v251 = vtanh.pop %v249
    %v252 = vadd.f32 %v250, 1.0
    %v253 = vadd.f32 %v251, 1.0
    %v254 = vmul.f32 %v238, %v252
    %v255 = vmul.f32 %v239, %v253
    %v256 = vpack.c.bf16 %v255, %v254
    %v257 = vld [vmem:[%s8] sm:$0xf]
    %v258 = vld [vmem:[%s8 + $0x4] sm:$0xf]
    %v259 = vld [vmem:[%s8 + $0x8] sm:$0xf]
    %v260 = vld [vmem:[%s8 + $0xc] sm:$0xf]
    %v261 = vld [vmem:[%s8 + $0x10] sm:$0xf]
    %v262 = vld [vmem:[%s8 + $0x14] sm:$0xf]
    %v263 = vld [vmem:[%s8 + $0x18] sm:$0xf]
    %v264 = vld [vmem:[%s8 + $0x1c] sm:$0xf]
    %v265 = vld [vmem:[%s9] sm:$0x1]
    %v267 = vlaneseq
    %v268 = vshrl.u32 %v267, 7
    %v269 = vsub.s32 0, %v268
    %v270 = vrot.slane %v265, %v269
    %v280 = vunpack.c.l.b16 %v257
    %v281 = vunpack.c.l.b16 %v258
    %v282 = vunpack.c.l.b16 %v259
    %v283 = vunpack.c.l.b16 %v260
    %v284 = vunpack.c.l.b16 %v261
    %v285 = vunpack.c.l.b16 %v262
    %v286 = vunpack.c.l.b16 %v263
    %v287 = vunpack.c.l.b16 %v264
    %v288 = vpack.c.b16 %v281, %v280
    %v289 = vpack.c.b16 %v283, %v282
    %v290 = vpack.c.b16 %v285, %v284
    %v291 = vpack.c.b16 %v287, %v286
    %vm296 = vcmask 523264
    %v298 = vsel %vm296, %v256, 0
    %300 = vmatprep.subr.bf16.mxu0 0
    %301 = vmatpush1.bf16.msra.mxu0 %v288
    %302 = vmatprep.subr.bf16.mxu0 0
    %303 = vmatpush1.bf16.msra.mxu0 %v289
    %304 = vmatprep.subr.bf16.mxu0 0
    %305 = vmatpush1.bf16.msra.mxu0 %v290
    %306 = vmatprep.subr.bf16.mxu0 0
    %307 = vmatpush1.bf16.msra.mxu0 %v291
    %308 = vmatprep.subr.bf16.mxu0 0
    %309 = vmatpush1.bf16.msra.mxu0 0
    %310 = vmatprep.subr.bf16.mxu0 0
    %311 = vmatpush1.bf16.msra.mxu0 0
    %312 = vmatprep.subr.bf16.mxu0 0
    %313 = vmatpush1.bf16.msra.mxu0 0
    %314 = vmatprep.subr.bf16.mxu0 0
    %315 = vmatpush1.bf16.msra.mxu0 0
    %316 = vmatprep.subr.bf16.mxu0 0
    %317 = vmatpush1.bf16.msra.mxu0 0
    %318 = vmatprep.subr.bf16.mxu0 0
    %319 = vmatpush1.bf16.msra.mxu0 0
    %320 = vmatprep.subr.bf16.mxu0 0
    %321 = vmatpush1.bf16.msra.mxu0 0
    %322 = vmatprep.subr.bf16.mxu0 0
    %323 = vmatpush1.bf16.msra.mxu0 0
    %324 = vmatprep.subr.bf16.mxu0 0
    %325 = vmatpush1.bf16.msra.mxu0 0
    %326 = vmatprep.subr.bf16.mxu0 0
    %327 = vmatpush1.bf16.msra.mxu0 0
    %328 = vmatprep.subr.bf16.mxu0 0
    %329 = vmatpush1.bf16.msra.mxu0 0
    %330 = vmatprep.subr.bf16.mxu0 0
    %331 = vmatpush1.bf16.msra.mxu0 0
    %332 = vmatprep.mubr.bf16.mxu0 0
    %333 = vmatmul.mubr.bf16.gmra.mrb[0].mxu0 %v298
    %v334 = vpop.f32.mrb[0].mxu0
    %v335 = vadd.f32 %v270, %v334
    %v336 = vpop.f32.mrb[0].mxu0
    %v337 = vpop.f32.mrb[0].mxu0
    %v338 = vadd.f32 %v270, %v337
    %v339 = vpop.f32.mrb[0].mxu0
    %340 = vdwg.mxu0
    %v341 = vadd.f32 %v335, %v168
    %v342 = vadd.f32 %v338, %v169
    %v343 = vld [vmem:[%s10] sm:$0x1]
    %v344 = vld [vmem:[%s11] sm:$0x1]
    %v345 = vsel %vm76, %v341, 0.0
    %346 = vadd.xlane.f32.xlu0 %v345
    %v347 = vpop.xlane.xlu0 %346
    %v348 = vsel %vm76, %v342, 0.0
    %349 = vadd.xlane.f32.xlu0 %v348
    %v350 = vpop.xlane.xlu0 %349
    %v351 = vmul.f32 %v347, %v133
    %v352 = vmul.f32 %v350, %v133
    %v353 = vsub.f32 %v341, %v351
    %v354 = vsub.f32 %v342, %v352
    %v355 = vmul.f32 %v353, %v353
    %v356 = vmul.f32 %v354, %v354
    %v357 = vsel %vm76, %v355, 0.0
    %358 = vadd.xlane.f32.xlu0 %v357
    %v359 = vpop.xlane.xlu0 %358
    %v360 = vsel %vm76, %v356, 0.0
    %361 = vadd.xlane.f32.xlu0 %v360
    %v362 = vpop.xlane.xlu0 %361
    %v363 = vmul.f32 %v359, %v133
    %v364 = vmul.f32 %v362, %v133
    %v365 = vadd.f32 %v363, 1e-12
    %v366 = vadd.f32 %v364, 1e-12
    %v367 = vrsqrt.pop %v365
    %v368 = vrsqrt.pop %v366
    %v369 = vmul.f32 %v353, %v367
    %v370 = vmul.f32 %v354, %v368
    %v372 = vlaneseq
    %v373 = vshrl.u32 %v372, 7
    %v374 = vsub.s32 0, %v373
    %v375 = vrot.slane %v343, %v374
    %v377 = vmul.f32 %v369, %v375
    %v378 = vmul.f32 %v370, %v375
    %v380 = vlaneseq
    %v381 = vshrl.u32 %v380, 7
    %v382 = vsub.s32 0, %v381
    %v383 = vrot.slane %v344, %v382
    %v385 = vadd.f32 %v377, %v383
    %v386 = vadd.f32 %v378, %v383
    %387 = vst.msk [vmem:[#allocation2] sm:$0xff] %vm76, %v385
    %388 = vst.msk [vmem:[#allocation2 + $0x8] sm:$0xff] %vm76, %v386
    %v389 = vpack.c.bf16 %v386, %v385
    %v391 = vunpack.c.l.b16 %v389
    %v392 = vunpack.c.h.b16 %v389
    %v393 = vpack.c.b16 %v391, %v391
    %v394 = vpack.c.b16 %v392, %v392
    %vm397 = vcmask 257024
    %398 = vst.msk [vmem:[#allocation4] sm:$0xf] %vm397, %v393
    %399 = vst.msk [vmem:[#allocation4 + $0x4] sm:$0xf] %vm397, %v394
    // Predicated region
    $region50: #{bert_encoder_forward.11} parent=1 // pred_check
      _
    $region51: #{bert_encoder_forward.11} parent=1 // pred_check_branch
      %401 = sbr.rel (0) target = $region53
    $region52: #{bert_encoder_forward.11} parent=1 // pred_region
      %s403 = ssub.s32 256, 256
      %404 = vsyncadd [#allocation3], %s403
      %s405 = sshll.u32 [#allocation2], 4
      %s406 = int_to_ptr.vmem [resolvable:$true] %s405
      %411 = dma.vmem_to_hbm [thread:$0]  %s406, 256, %s12, [#allocation3], 128, 128, 8
    $region53: #{bert_encoder_forward.11} parent=1 // pred_fallthru
      _
    // Predicated region
    $region54: #{bert_encoder_forward.11} parent=1 // pred_check
      _
    $region55: #{bert_encoder_forward.11} parent=1 // pred_check_branch
      %413 = sbr.rel (0) target = $region57
    $region56: #{bert_encoder_forward.11} parent=1 // pred_region
      %s415 = ssub.s32 128, 128
      %416 = vsyncadd [#allocation5], %s415
      %s417 = sshll.u32 [#allocation4], 4
      %s418 = int_to_ptr.vmem [resolvable:$true] %s417
      %423 = dma.vmem_to_hbm [thread:$0]  %s418, 128, %s13, [#allocation5], 64, 64, 4
    $region57: #{bert_encoder_forward.11} parent=1 // pred_fallthru
      _
    // Predicated region
    $region58: #{bert_encoder_forward.11} parent=1 // pred_check
      _
    $region59: #{bert_encoder_forward.11} parent=1 // pred_check_branch
      %425 = sbr.rel (0) target = $region61
    $region60: #{bert_encoder_forward.11} parent=1 // pred_region
      %426 = dma.done [#allocation3], 256
    $region61: #{bert_encoder_forward.11} parent=1 // pred_fallthru
      _
    // Predicated region
    $region62: #{bert_encoder_forward.11} parent=1 // pred_check
      _
    $region63: #{bert_encoder_forward.11} parent=1 // pred_check_branch
      %428 = sbr.rel (0) target = $region65
    $region64: #{bert_encoder_forward.11} parent=1 // pred_region
      %429 = dma.done [#allocation5], 128
    $region65: #{bert_encoder_forward.11} parent=1 // pred_fallthru
      _
    %430 = vsyncpa [#allocation3], 1
    %431 = vsyncpa [#allocation5], 1

// kernel: bert_encoder_forward.8
$region0: #{bert_encoder_forward.8}
  #allocation0 [shape = 'u32[]', space=smem, size = 0x4, offset = 0x4, fixed_abs, tag = 'smem constant byte address 0x4 - core index']
  #allocation1 [shape = 'u32[144,128]{1,0:T(1,128)}', space=vmem, size = 0x12000, scoped, tag = 'internal scratch']
  %s0 = inlined_call_operand.vmem [shape: bf16[16,32], index: 0, kind: input, shape index: {}]
  %s1 = inlined_call_operand.vmem [shape: f32[16,32], index: 1, kind: input, shape index: {}]
  %s2 = inlined_call_operand.vmem [shape: bf16[32,32], index: 2, kind: input, shape index: {}]
  %s3 = inlined_call_operand.vmem [shape: f32[1,32], index: 3, kind: input, shape index: {}]
  %s4 = inlined_call_operand.vmem [shape: f32[1,32], index: 4, kind: input, shape index: {}]
  %s5 = inlined_call_operand.vmem [shape: f32[1,32], index: 5, kind: input, shape index: {}]
  %s6 = inlined_call_operand.vmem [shape: bf16[32,64], index: 6, kind: input, shape index: {}]
  %s7 = inlined_call_operand.vmem [shape: f32[1,64], index: 7, kind: input, shape index: {}]
  %s8 = inlined_call_operand.vmem [shape: bf16[64,32], index: 8, kind: input, shape index: {}]
  %s9 = inlined_call_operand.vmem [shape: f32[1,32], index: 9, kind: input, shape index: {}]
  %s10 = inlined_call_operand.vmem [shape: f32[1,32], index: 10, kind: input, shape index: {}]
  %s11 = inlined_call_operand.vmem [shape: f32[1,32], index: 11, kind: input, shape index: {}]
  %s12 = inlined_call_operand.vmem [shape: f32[16,32], index: 12, kind: output, shape index: {0}]
  %s13 = inlined_call_operand.vmem [shape: bf16[16,32], index: 13, kind: output, shape index: {1}]
  %14 = xla_tuple %s12, %s13
  %s15 = sld [smem:[#allocation0]]
  $region66: #{bert_encoder_forward.8} parent=0
    _
  %s17 = ssub.s32 1, %s15
  %s18 = scalar_select 0, %s17, %s15
  // Predicated region
  $region2: #{bert_encoder_forward.8} parent=0 // pred_check
    _
  $region3: #{bert_encoder_forward.8} parent=0 // pred_check_branch
    %20 = sbr.rel (0) target = $region5
  $region4: #{bert_encoder_forward.8} parent=0 // pred_region
    _
  $region5: #{bert_encoder_forward.8} parent=0 // pred_fallthru
    _
  // Predicated region
  $region6: #{bert_encoder_forward.8} parent=0 // pred_check
    _
  $region7: #{bert_encoder_forward.8} parent=0 // pred_check_branch
    %22 = sbr.rel (0) target = $region9
  $region8: #{bert_encoder_forward.8} parent=0 // pred_region
    _
  $region9: #{bert_encoder_forward.8} parent=0 // pred_fallthru
    _
  // Predicated region
  $region10: #{bert_encoder_forward.8} parent=0 // pred_check
    _
  $region11: #{bert_encoder_forward.8} parent=0 // pred_check_branch
    %24 = sbr.rel (0) target = $region13
  $region12: #{bert_encoder_forward.8} parent=0 // pred_region
    _
  $region13: #{bert_encoder_forward.8} parent=0 // pred_fallthru
    _
  // Predicated region
  $region14: #{bert_encoder_forward.8} parent=0 // pred_check
    _
  $region15: #{bert_encoder_forward.8} parent=0 // pred_check_branch
    %26 = sbr.rel (0) target = $region17
  $region16: #{bert_encoder_forward.8} parent=0 // pred_region
    _
  $region17: #{bert_encoder_forward.8} parent=0 // pred_fallthru
    _
  // Predicated region
  $region18: #{bert_encoder_forward.8} parent=0 // pred_check
    _
  $region19: #{bert_encoder_forward.8} parent=0 // pred_check_branch
    %28 = sbr.rel (0) target = $region21
  $region20: #{bert_encoder_forward.8} parent=0 // pred_region
    _
  $region21: #{bert_encoder_forward.8} parent=0 // pred_fallthru
    _
  // Predicated region
  $region22: #{bert_encoder_forward.8} parent=0 // pred_check
    _
  $region23: #{bert_encoder_forward.8} parent=0 // pred_check_branch
    %30 = sbr.rel (0) target = $region25
  $region24: #{bert_encoder_forward.8} parent=0 // pred_region
    _
  $region25: #{bert_encoder_forward.8} parent=0 // pred_fallthru
    _
  // Predicated region
  $region26: #{bert_encoder_forward.8} parent=0 // pred_check
    _
  $region27: #{bert_encoder_forward.8} parent=0 // pred_check_branch
    %32 = sbr.rel (0) target = $region29
  $region28: #{bert_encoder_forward.8} parent=0 // pred_region
    _
  $region29: #{bert_encoder_forward.8} parent=0 // pred_fallthru
    _
  // Predicated region
  $region30: #{bert_encoder_forward.8} parent=0 // pred_check
    _
  $region31: #{bert_encoder_forward.8} parent=0 // pred_check_branch
    %34 = sbr.rel (0) target = $region33
  $region32: #{bert_encoder_forward.8} parent=0 // pred_region
    _
  $region33: #{bert_encoder_forward.8} parent=0 // pred_fallthru
    _
  // Predicated region
  $region34: #{bert_encoder_forward.8} parent=0 // pred_check
    _
  $region35: #{bert_encoder_forward.8} parent=0 // pred_check_branch
    %36 = sbr.rel (0) target = $region37
  $region36: #{bert_encoder_forward.8} parent=0 // pred_region
    _
  $region37: #{bert_encoder_forward.8} parent=0 // pred_fallthru
    _
  // Predicated region
  $region38: #{bert_encoder_forward.8} parent=0 // pred_check
    _
  $region39: #{bert_encoder_forward.8} parent=0 // pred_check_branch
    %38 = sbr.rel (0) target = $region41
  $region40: #{bert_encoder_forward.8} parent=0 // pred_region
    _
  $region41: #{bert_encoder_forward.8} parent=0 // pred_fallthru
    _
  // Predicated region
  $region42: #{bert_encoder_forward.8} parent=0 // pred_check
    _
  $region43: #{bert_encoder_forward.8} parent=0 // pred_check_branch
    %40 = sbr.rel (0) target = $region45
  $region44: #{bert_encoder_forward.8} parent=0 // pred_region
    _
  $region45: #{bert_encoder_forward.8} parent=0 // pred_fallthru
    _
  // Predicated region
  $region46: #{bert_encoder_forward.8} parent=0 // pred_check
    _
  $region47: #{bert_encoder_forward.8} parent=0 // pred_check_branch
    %42 = sbr.rel (0) target = $region49
  $region48: #{bert_encoder_forward.8} parent=0 // pred_region
    _
  $region49: #{bert_encoder_forward.8} parent=0 // pred_fallthru
    _
  %v44 = vld [vmem:[%s0] sm:$0xf]
  %v45 = vld [vmem:[%s0 + $0x4] sm:$0xf]
  %v46 = vld [vmem:[%s2] sm:$0xf]
  %v47 = vld [vmem:[%s2 + $0x4] sm:$0xf]
  %v48 = vld [vmem:[%s2 + $0x8] sm:$0xf]
  %v49 = vld [vmem:[%s2 + $0xc] sm:$0xf]
  %v50 = vld [vmem:[%s3] sm:$0x1]
  %v52 = vlaneseq
  %v53 = vshrl.u32 %v52, 7
  %v54 = vsub.s32 0, %v53
  %v55 = vrot.slane %v50, %v54
  %v59 = vunpack.c.l.b16 %v44
  %v60 = vunpack.c.l.b16 %v45
  %v61 = vpack.c.b16 %v60, %v59
  %v66 = vunpack.c.l.b16 %v46
  %v67 = vunpack.c.l.b16 %v47
  %v68 = vunpack.c.l.b16 %v48
  %v69 = vunpack.c.l.b16 %v49
  %v70 = vpack.c.b16 %v67, %v66
  %v71 = vpack.c.b16 %v69, %v68
  %vm74 = vcmask 261120
  %v76 = vsel %vm74, %v61, 0
  %78 = vmatprep.subr.bf16.mxu0 0
  %79 = vmatpush1.bf16.msra.mxu0 %v70
  %80 = vmatprep.subr.bf16.mxu0 0
  %81 = vmatpush1.bf16.msra.mxu0 %v71
  %82 = vmatprep.subr.bf16.mxu0 0
  %83 = vmatpush1.bf16.msra.mxu0 0
  %84 = vmatprep.subr.bf16.mxu0 0
  %85 = vmatpush1.bf16.msra.mxu0 0
  %86 = vmatprep.subr.bf16.mxu0 0
  %87 = vmatpush1.bf16.msra.mxu0 0
  %88 = vmatprep.subr.bf16.mxu0 0
  %89 = vmatpush1.bf16.msra.mxu0 0
  %90 = vmatprep.subr.bf16.mxu0 0
  %91 = vmatpush1.bf16.msra.mxu0 0
  %92 = vmatprep.subr.bf16.mxu0 0
  %93 = vmatpush1.bf16.msra.mxu0 0
  %94 = vmatprep.subr.bf16.mxu0 0
  %95 = vmatpush1.bf16.msra.mxu0 0
  %96 = vmatprep.subr.bf16.mxu0 0
  %97 = vmatpush1.bf16.msra.mxu0 0
  %98 = vmatprep.subr.bf16.mxu0 0
  %99 = vmatpush1.bf16.msra.mxu0 0
  %100 = vmatprep.subr.bf16.mxu0 0
  %101 = vmatpush1.bf16.msra.mxu0 0
  %102 = vmatprep.subr.bf16.mxu0 0
  %103 = vmatpush1.bf16.msra.mxu0 0
  %104 = vmatprep.subr.bf16.mxu0 0
  %105 = vmatpush1.bf16.msra.mxu0 0
  %106 = vmatprep.subr.bf16.mxu0 0
  %107 = vmatpush1.bf16.msra.mxu0 0
  %108 = vmatprep.subr.bf16.mxu0 0
  %109 = vmatpush1.bf16.msra.mxu0 0
  %110 = vmatprep.mubr.bf16.mxu0 0
  %111 = vmatmul.mubr.bf16.gmra.mrb[0].mxu0 %v76
  %v112 = vpop.f32.mrb[0].mxu0
  %v113 = vadd.f32 %v55, %v112
  %v114 = vpop.f32.mrb[0].mxu0
  %v115 = vpop.f32.mrb[0].mxu0
  %v116 = vadd.f32 %v55, %v115
  %v117 = vpop.f32.mrb[0].mxu0
  %118 = vdwg.mxu0
  %v119 = vld [vmem:[%s1] sm:$0xff]
  %v120 = vld [vmem:[%s1 + $0x8] sm:$0xff]
  %v121 = vadd.f32 %v113, %v119
  %v122 = vadd.f32 %v116, %v120
  %v123 = vld [vmem:[%s4] sm:$0x1]
  %v124 = vld [vmem:[%s5] sm:$0x1]
  %v125 = vsel %vm74, %v121, 0.0
  %126 = vadd.xlane.f32.xlu0 %v125
  %v127 = vpop.xlane.xlu0 %126
  %v128 = vsel %vm74, %v122, 0.0
  %129 = vadd.xlane.f32.xlu0 %v128
  %v130 = vpop.xlane.xlu0 %129
  %v131 = vrcp.pop 32.0
  %v132 = vmul.f32 %v127, %v131
  %v133 = vmul.f32 %v130, %v131
  %v134 = vsub.f32 %v121, %v132
  %v135 = vsub.f32 %v122, %v133
  %v136 = vmul.f32 %v134, %v134
  %v137 = vmul.f32 %v135, %v135
  %v138 = vsel %vm74, %v136, 0.0
  %139 = vadd.xlane.f32.xlu0 %v138
  %v140 = vpop.xlane.xlu0 %139
  %v141 = vsel %vm74, %v137, 0.0
  %142 = vadd.xlane.f32.xlu0 %v141
  %v143 = vpop.xlane.xlu0 %142
  %v144 = vmul.f32 %v140, %v131
  %v145 = vmul.f32 %v143, %v131
  %v146 = vadd.f32 %v144, 1e-12
  %v147 = vadd.f32 %v145, 1e-12
  %v148 = vrsqrt.pop %v146
  %v149 = vrsqrt.pop %v147
  %v150 = vmul.f32 %v134, %v148
  %v151 = vmul.f32 %v135, %v149
  %v153 = vlaneseq
  %v154 = vshrl.u32 %v153, 7
  %v155 = vsub.s32 0, %v154
  %v156 = vrot.slane %v123, %v155
  %v158 = vmul.f32 %v150, %v156
  %v159 = vmul.f32 %v151, %v156
  %v161 = vlaneseq
  %v162 = vshrl.u32 %v161, 7
  %v163 = vsub.s32 0, %v162
  %v164 = vrot.slane %v124, %v163
  %v166 = vadd.f32 %v158, %v164
  %v167 = vadd.f32 %v159, %v164
  %v168 = vpack.c.bf16 %v167, %v166
  %v169 = vld [vmem:[%s6] sm:$0xf]
  %v170 = vld [vmem:[%s6 + $0x4] sm:$0xf]
  %v171 = vld [vmem:[%s6 + $0x8] sm:$0xf]
  %v172 = vld [vmem:[%s6 + $0xc] sm:$0xf]
  %v173 = vld [vmem:[%s7] sm:$0x1]
  %v175 = vlaneseq
  %v176 = vshrl.u32 %v175, 7
  %v177 = vsub.s32 0, %v176
  %v178 = vrot.slane %v173, %v177
  %v184 = vunpack.c.l.b16 %v169
  %v185 = vunpack.c.l.b16 %v170
  %v186 = vunpack.c.l.b16 %v171
  %v187 = vunpack.c.l.b16 %v172
  %v188 = vpack.c.b16 %v185, %v184
  %v189 = vpack.c.b16 %v187, %v186
  %v193 = vsel %vm74, %v168, 0
  %195 = vmatprep.subr.bf16.mxu0 0
  %196 = vmatpush1.bf16.msra.mxu0 %v188
  %197 = vmatprep.subr.bf16.mxu0 0
  %198 = vmatpush1.bf16.msra.mxu0 %v189
  %199 = vmatprep.subr.bf16.mxu0 0
  %200 = vmatpush1.bf16.msra.mxu0 0
  %201 = vmatprep.subr.bf16.mxu0 0
  %202 = vmatpush1.bf16.msra.mxu0 0
  %203 = vmatprep.subr.bf16.mxu0 0
  %204 = vmatpush1.bf16.msra.mxu0 0
  %205 = vmatprep.subr.bf16.mxu0 0
  %206 = vmatpush1.bf16.msra.mxu0 0
  %207 = vmatprep.subr.bf16.mxu0 0
  %208 = vmatpush1.bf16.msra.mxu0 0
  %209 = vmatprep.subr.bf16.mxu0 0
  %210 = vmatpush1.bf16.msra.mxu0 0
  %211 = vmatprep.subr.bf16.mxu0 0
  %212 = vmatpush1.bf16.msra.mxu0 0
  %213 = vmatprep.subr.bf16.mxu0 0
  %214 = vmatpush1.bf16.msra.mxu0 0
  %215 = vmatprep.subr.bf16.mxu0 0
  %216 = vmatpush1.bf16.msra.mxu0 0
  %217 = vmatprep.subr.bf16.mxu0 0
  %218 = vmatpush1.bf16.msra.mxu0 0
  %219 = vmatprep.subr.bf16.mxu0 0
  %220 = vmatpush1.bf16.msra.mxu0 0
  %221 = vmatprep.subr.bf16.mxu0 0
  %222 = vmatpush1.bf16.msra.mxu0 0
  %223 = vmatprep.subr.bf16.mxu0 0
  %224 = vmatpush1.bf16.msra.mxu0 0
  %225 = vmatprep.subr.bf16.mxu0 0
  %226 = vmatpush1.bf16.msra.mxu0 0
  %227 = vmatprep.mubr.bf16.mxu0 0
  %228 = vmatmul.mubr.bf16.gmra.mrb[0].mxu0 %v193
  %v229 = vpop.f32.mrb[0].mxu0
  %v230 = vadd.f32 %v178, %v229
  %v231 = vpop.f32.mrb[0].mxu0
  %v232 = vpop.f32.mrb[0].mxu0
  %v233 = vadd.f32 %v178, %v232
  %v234 = vpop.f32.mrb[0].mxu0
  %235 = vdwg.mxu0
  %v236 = vmul.f32 %v230, 0.5
  %v237 = vmul.f32 %v233, 0.5
  %v238 = vmul.f32 %v230, 0.044715
  %v239 = vmul.f32 %v233, 0.044715
  %v240 = vmul.f32 %v238, %v230
  %v241 = vmul.f32 %v239, %v233
  %v242 = vmul.f32 %v240, %v230
  %v243 = vmul.f32 %v241, %v233
  %v244 = vadd.f32 %v230, %v242
  %v245 = vadd.f32 %v233, %v243
  %v246 = vmul.f32 %v244, 0.7978846
  %v247 = vmul.f32 %v245, 0.7978846
  %v248 = vtanh.pop %v246
  %v249 = vtanh.pop %v247
  %v250 = vadd.f32 %v248, 1.0
  %v251 = vadd.f32 %v249, 1.0
  %v252 = vmul.f32 %v236, %v250
  %v253 = vmul.f32 %v237, %v251
  %v254 = vpack.c.bf16 %v253, %v252
  %v255 = vld [vmem:[%s8] sm:$0xf]
  %v256 = vld [vmem:[%s8 + $0x4] sm:$0xf]
  %v257 = vld [vmem:[%s8 + $0x8] sm:$0xf]
  %v258 = vld [vmem:[%s8 + $0xc] sm:$0xf]
  %v259 = vld [vmem:[%s8 + $0x10] sm:$0xf]
  %v260 = vld [vmem:[%s8 + $0x14] sm:$0xf]
  %v261 = vld [vmem:[%s8 + $0x18] sm:$0xf]
  %v262 = vld [vmem:[%s8 + $0x1c] sm:$0xf]
  %v263 = vld [vmem:[%s9] sm:$0x1]
  %v265 = vlaneseq
  %v266 = vshrl.u32 %v265, 7
  %v267 = vsub.s32 0, %v266
  %v268 = vrot.slane %v263, %v267
  %v278 = vunpack.c.l.b16 %v255
  %v279 = vunpack.c.l.b16 %v256
  %v280 = vunpack.c.l.b16 %v257
  %v281 = vunpack.c.l.b16 %v258
  %v282 = vunpack.c.l.b16 %v259
  %v283 = vunpack.c.l.b16 %v260
  %v284 = vunpack.c.l.b16 %v261
  %v285 = vunpack.c.l.b16 %v262
  %v286 = vpack.c.b16 %v279, %v278
  %v287 = vpack.c.b16 %v281, %v280
  %v288 = vpack.c.b16 %v283, %v282
  %v289 = vpack.c.b16 %v285, %v284
  %vm294 = vcmask 523264
  %v296 = vsel %vm294, %v254, 0
  %298 = vmatprep.subr.bf16.mxu0 0
  %299 = vmatpush1.bf16.msra.mxu0 %v286
  %300 = vmatprep.subr.bf16.mxu0 0
  %301 = vmatpush1.bf16.msra.mxu0 %v287
  %302 = vmatprep.subr.bf16.mxu0 0
  %303 = vmatpush1.bf16.msra.mxu0 %v288
  %304 = vmatprep.subr.bf16.mxu0 0
  %305 = vmatpush1.bf16.msra.mxu0 %v289
  %306 = vmatprep.subr.bf16.mxu0 0
  %307 = vmatpush1.bf16.msra.mxu0 0
  %308 = vmatprep.subr.bf16.mxu0 0
  %309 = vmatpush1.bf16.msra.mxu0 0
  %310 = vmatprep.subr.bf16.mxu0 0
  %311 = vmatpush1.bf16.msra.mxu0 0
  %312 = vmatprep.subr.bf16.mxu0 0
  %313 = vmatpush1.bf16.msra.mxu0 0
  %314 = vmatprep.subr.bf16.mxu0 0
  %315 = vmatpush1.bf16.msra.mxu0 0
  %316 = vmatprep.subr.bf16.mxu0 0
  %317 = vmatpush1.bf16.msra.mxu0 0
  %318 = vmatprep.subr.bf16.mxu0 0
  %319 = vmatpush1.bf16.msra.mxu0 0
  %320 = vmatprep.subr.bf16.mxu0 0
  %321 = vmatpush1.bf16.msra.mxu0 0
  %322 = vmatprep.subr.bf16.mxu0 0
  %323 = vmatpush1.bf16.msra.mxu0 0
  %324 = vmatprep.subr.bf16.mxu0 0
  %325 = vmatpush1.bf16.msra.mxu0 0
  %326 = vmatprep.subr.bf16.mxu0 0
  %327 = vmatpush1.bf16.msra.mxu0 0
  %328 = vmatprep.subr.bf16.mxu0 0
  %329 = vmatpush1.bf16.msra.mxu0 0
  %330 = vmatprep.mubr.bf16.mxu0 0
  %331 = vmatmul.mubr.bf16.gmra.mrb[0].mxu0 %v296
  %v332 = vpop.f32.mrb[0].mxu0
  %v333 = vadd.f32 %v268, %v332
  %v334 = vpop.f32.mrb[0].mxu0
  %v335 = vpop.f32.mrb[0].mxu0
  %v336 = vadd.f32 %v268, %v335
  %v337 = vpop.f32.mrb[0].mxu0
  %338 = vdwg.mxu0
  %v339 = vadd.f32 %v333, %v166
  %v340 = vadd.f32 %v336, %v167
  %v341 = vld [vmem:[%s10] sm:$0x1]
  %v342 = vld [vmem:[%s11] sm:$0x1]
  %v343 = vsel %vm74, %v339, 0.0
  %344 = vadd.xlane.f32.xlu0 %v343
  %v345 = vpop.xlane.xlu0 %344
  %v346 = vsel %vm74, %v340, 0.0
  %347 = vadd.xlane.f32.xlu0 %v346
  %v348 = vpop.xlane.xlu0 %347
  %v349 = vmul.f32 %v345, %v131
  %v350 = vmul.f32 %v348, %v131
  %v351 = vsub.f32 %v339, %v349
  %v352 = vsub.f32 %v340, %v350
  %v353 = vmul.f32 %v351, %v351
  %v354 = vmul.f32 %v352, %v352
  %v355 = vsel %vm74, %v353, 0.0
  %356 = vadd.xlane.f32.xlu0 %v355
  %v357 = vpop.xlane.xlu0 %356
  %v358 = vsel %vm74, %v354, 0.0
  %359 = vadd.xlane.f32.xlu0 %v358
  %v360 = vpop.xlane.xlu0 %359
  %v361 = vmul.f32 %v357, %v131
  %v362 = vmul.f32 %v360, %v131
  %v363 = vadd.f32 %v361, 1e-12
  %v364 = vadd.f32 %v362, 1e-12
  %v365 = vrsqrt.pop %v363
  %v366 = vrsqrt.pop %v364
  %v367 = vmul.f32 %v351, %v365
  %v368 = vmul.f32 %v352, %v366
  %v370 = vlaneseq
  %v371 = vshrl.u32 %v370, 7
  %v372 = vsub.s32 0, %v371
  %v373 = vrot.slane %v341, %v372
  %v375 = vmul.f32 %v367, %v373
  %v376 = vmul.f32 %v368, %v373
  %v378 = vlaneseq
  %v379 = vshrl.u32 %v378, 7
  %v380 = vsub.s32 0, %v379
  %v381 = vrot.slane %v342, %v380
  %v383 = vadd.f32 %v375, %v381
  %v384 = vadd.f32 %v376, %v381
  %385 = vst.msk [vmem:[%s12] sm:$0xff] %vm74, %v383
  %386 = vst.msk [vmem:[%s12 + $0x8] sm:$0xff] %vm74, %v384
  %v387 = vpack.c.bf16 %v384, %v383
  %v389 = vunpack.c.l.b16 %v387
  %v390 = vunpack.c.h.b16 %v387
  %v391 = vpack.c.b16 %v389, %v389
  %v392 = vpack.c.b16 %v390, %v390
  %vm395 = vcmask 257024
  %396 = vst.msk [vmem:[%s13] sm:$0xf] %vm395, %v391
  %397 = vst.msk [vmem:[%s13 + $0x4] sm:$0xf] %vm395, %v392
  // Predicated region
  $region50: #{bert_encoder_forward.8} parent=0 // pred_check
    _
  $region51: #{bert_encoder_forward.8} parent=0 // pred_check_branch
    %399 = sbr.rel (0) target = $region53
  $region52: #{bert_encoder_forward.8} parent=0 // pred_region
    _
  $region53: #{bert_encoder_forward.8} parent=0 // pred_fallthru
    _
  // Predicated region
  $region54: #{bert_encoder_forward.8} parent=0 // pred_check
    _
  $region55: #{bert_encoder_forward.8} parent=0 // pred_check_branch
    %401 = sbr.rel (0) target = $region57
  $region56: #{bert_encoder_forward.8} parent=0 // pred_region
    _
  $region57: #{bert_encoder_forward.8} parent=0 // pred_fallthru
    _
  // Predicated region
  $region58: #{bert_encoder_forward.8} parent=0 // pred_check
    _
  $region59: #{bert_encoder_forward.8} parent=0 // pred_check_branch
    %403 = sbr.rel (0) target = $region61
  $region60: #{bert_encoder_forward.8} parent=0 // pred_region
    _
  $region61: #{bert_encoder_forward.8} parent=0 // pred_fallthru
    _
  // Predicated region
  $region62: #{bert_encoder_forward.8} parent=0 // pred_check
    _
  $region63: #{bert_encoder_forward.8} parent=0 // pred_check_branch
    %405 = sbr.rel (0) target = $region65
  $region64: #{bert_encoder_forward.8} parent=0 // pred_region
    _
  $region65: #{bert_encoder_forward.8} parent=0 // pred_fallthru
    _

// kernel: bert_encoder_forward.7
$region0: #{bert_encoder_forward.7}
  #allocation0 [shape = 'u32[]', space=smem, size = 0x4, offset = 0x4, fixed_abs, tag = 'smem constant byte address 0x4 - core index']
  #allocation1 [shape = 'u32[144,128]{1,0:T(1,128)}', space=vmem, size = 0x12000, scoped, tag = 'internal scratch']
  %s0 = inlined_call_operand.vmem [shape: bf16[16,32], index: 0, kind: input, shape index: {}]
  %s1 = inlined_call_operand.vmem [shape: bf16[16,32], index: 1, kind: input, shape index: {}]
  %s2 = inlined_call_operand.vmem [shape: bf16[16,32], index: 2, kind: input, shape index: {}]
  %s3 = inlined_call_operand.vmem [shape: f32[2,1,8], index: 3, kind: input, shape index: {}]
  %s4 = inlined_call_operand.vmem [shape: bf16[16,32], index: 4, kind: output, shape index: {}]
  %s5 = sld [smem:[#allocation0]]
  $region49: #{bert_encoder_forward.7} parent=0
    _
  %s7 = ssub.s32 1, %s5
  %s8 = scalar_select 0, %s7, %s5
  loop: start=0, step=1, limit=4
  $region2: #{bert_encoder_forward.7} parent=0 // loop_pre_header
    _
  $region3: #{bert_encoder_forward.7} parent=0 // loop_header
    %s10 = sphi 0, %s14
    %p11 = scmp.ge.s32.totalorder %s10, 4
    %s20 = sphi 0, %s22
    %s23 = sphi 0, %s20
    %s24 = sphi 0, %s23
    %s40 = sphi 0, %s24
    %s46 = sphi 0, %s48
    %s49 = sphi 0, %s46
    %s50 = sphi 0, %s49
    %s66 = sphi 0, %s50
    %s72 = sphi 0, %s74
    %s75 = sphi 0, %s72
    %s76 = sphi 0, %s75
    %s92 = sphi 0, %s76
    %s98 = sphi 0, %s100
    %s101 = sphi 0, %s98
    %s102 = sphi 0, %s101
    %s118 = sphi 0, %s102
    %s124 = sphi 0, %s126
    %s127 = sphi 0, %s124
    %s128 = sphi 0, %s127
    %s144 = sphi 0, %s128
  $region4: #{bert_encoder_forward.7} parent=0 // loop_header_branch
    %13 = sbr.rel (%p11) target = $region8
  $region5: #{bert_encoder_forward.7} parent=0 // loop_body
    %s15 = ssub.s32 %s10, 1
    %s16 = ssub.s32 %s10, 2
    %s17 = sadd.s32 %s10, 1
    %s18 = ssub.s32 %s10, %s17
    %p19 = scmp.eq.s32.totalorder %s18, 0
    %s21 = sadd.s32 %s20, 1
    %s22 = scalar_select %p19, %s20, %s21
    %p25 = pneg %p19
    %p26 = scmp.eq.s32.totalorder %s10, 1
    %p27 = por %p25, %p26
    %p28 = scmp.ne.s32.totalorder %s20, %s23
    %p29 = scmp.eq.s32.totalorder %s10, 0
    %p30 = por %p28, %p29
    %p31 = scmp.ne.s32.totalorder %s20, %s23
    %p32 = scmp.eq.s32.totalorder %s15, 1
    %p33 = por %p31, %p32
    %p34 = scmp.ne.s32.totalorder %s23, %s24
    %p35 = scmp.eq.s32.totalorder %s15, 0
    %p36 = por %p34, %p35
    %p37 = scmp.ne.s32.totalorder %s23, %s24
    %p38 = scmp.eq.s32.totalorder %s16, 1
    %p39 = por %p37, %p38
    %p41 = scmp.ne.s32.totalorder %s24, %s40
    %p42 = scmp.eq.s32.totalorder %s16, 0
    %p43 = por %p41, %p42
    %s44 = ssub.s32 %s10, %s17
    %p45 = scmp.eq.s32.totalorder %s44, 0
    %s47 = sadd.s32 %s46, 1
    %s48 = scalar_select %p45, %s46, %s47
    %p51 = pneg %p45
    %p52 = scmp.eq.s32.totalorder %s10, 1
    %p53 = por %p51, %p52
    %p54 = scmp.ne.s32.totalorder %s46, %s49
    %p55 = scmp.eq.s32.totalorder %s10, 0
    %p56 = por %p54, %p55
    %p57 = scmp.ne.s32.totalorder %s46, %s49
    %p58 = scmp.eq.s32.totalorder %s15, 1
    %p59 = por %p57, %p58
    %p60 = scmp.ne.s32.totalorder %s49, %s50
    %p61 = scmp.eq.s32.totalorder %s15, 0
    %p62 = por %p60, %p61
    %p63 = scmp.ne.s32.totalorder %s49, %s50
    %p64 = scmp.eq.s32.totalorder %s16, 1
    %p65 = por %p63, %p64
    %p67 = scmp.ne.s32.totalorder %s50, %s66
    %p68 = scmp.eq.s32.totalorder %s16, 0
    %p69 = por %p67, %p68
    %s70 = ssub.s32 %s10, %s17
    %p71 = scmp.eq.s32.totalorder %s70, 0
    %s73 = sadd.s32 %s72, 1
    %s74 = scalar_select %p71, %s72, %s73
    %p77 = pneg %p71
    %p78 = scmp.eq.s32.totalorder %s10, 1
    %p79 = por %p77, %p78
    %p80 = scmp.ne.s32.totalorder %s72, %s75
    %p81 = scmp.eq.s32.totalorder %s10, 0
    %p82 = por %p80, %p81
    %p83 = scmp.ne.s32.totalorder %s72, %s75
    %p84 = scmp.eq.s32.totalorder %s15, 1
    %p85 = por %p83, %p84
    %p86 = scmp.ne.s32.totalorder %s75, %s76
    %p87 = scmp.eq.s32.totalorder %s15, 0
    %p88 = por %p86, %p87
    %p89 = scmp.ne.s32.totalorder %s75, %s76
    %p90 = scmp.eq.s32.totalorder %s16, 1
    %p91 = por %p89, %p90
    %p93 = scmp.ne.s32.totalorder %s76, %s92
    %p94 = scmp.eq.s32.totalorder %s16, 0
    %p95 = por %p93, %p94
    %s96 = ssub.s32 %s10, %s17
    %p97 = scmp.eq.s32.totalorder %s96, 0
    %s99 = sadd.s32 %s98, 1
    %s100 = scalar_select %p97, %s98, %s99
    %p103 = pneg %p97
    %p104 = scmp.eq.s32.totalorder %s10, 1
    %p105 = por %p103, %p104
    %p106 = scmp.ne.s32.totalorder %s98, %s101
    %p107 = scmp.eq.s32.totalorder %s10, 0
    %p108 = por %p106, %p107
    %p109 = scmp.ne.s32.totalorder %s98, %s101
    %p110 = scmp.eq.s32.totalorder %s15, 1
    %p111 = por %p109, %p110
    %p112 = scmp.ne.s32.totalorder %s101, %s102
    %p113 = scmp.eq.s32.totalorder %s15, 0
    %p114 = por %p112, %p113
    %p115 = scmp.ne.s32.totalorder %s101, %s102
    %p116 = scmp.eq.s32.totalorder %s16, 1
    %p117 = por %p115, %p116
    %p119 = scmp.ne.s32.totalorder %s102, %s118
    %p120 = scmp.eq.s32.totalorder %s16, 0
    %p121 = por %p119, %p120
    %s122 = ssub.s32 %s10, %s17
    %p123 = scmp.eq.s32.totalorder %s122, 0
    %s125 = sadd.s32 %s124, 1
    %s126 = scalar_select %p123, %s124, %s125
    %p129 = pneg %p123
    %p130 = scmp.eq.s32.totalorder %s10, 1
    %p131 = por %p129, %p130
    %p132 = scmp.ne.s32.totalorder %s124, %s127
    %p133 = scmp.eq.s32.totalorder %s10, 0
    %p134 = por %p132, %p133
    %p135 = scmp.ne.s32.totalorder %s124, %s127
    %p136 = scmp.eq.s32.totalorder %s15, 1
    %p137 = por %p135, %p136
    %p138 = scmp.ne.s32.totalorder %s127, %s128
    %p139 = scmp.eq.s32.totalorder %s15, 0
    %p140 = por %p138, %p139
    %p141 = scmp.ne.s32.totalorder %s127, %s128
    %p142 = scmp.eq.s32.totalorder %s16, 1
    %p143 = por %p141, %p142
    %p145 = scmp.ne.s32.totalorder %s128, %s144
    %p146 = scmp.eq.s32.totalorder %s16, 0
    %p147 = por %p145, %p146
    %p148 = scmp.le.s32.totalorder 1, %s10
    %p149 = scmp.lt.s32.totalorder %s10, 3
    %p150 = pnand %p148, %p149
    %p151 = pneg %p150
    // Predicated region
    $region9: #{bert_encoder_forward.7} parent=5 // pred_check
      _
    $region10: #{bert_encoder_forward.7} parent=5 // pred_check_branch
      %153 = sbr.rel (%p150) target = $region12
    $region11: #{bert_encoder_forward.7} parent=5 // pred_region
      %s154 = ssub.s32 %s10, 1
    $region12: #{bert_encoder_forward.7} parent=5 // pred_fallthru
      _
    %p155 = scmp.lt.s32.totalorder %s10, 2
    // Predicated region
    $region13: #{bert_encoder_forward.7} parent=5 // pred_check
      %p156 = pneg %p155
    $region14: #{bert_encoder_forward.7} parent=5 // pred_check_branch
      %158 = sbr.rel (%p156) target = $region16
    $region15: #{bert_encoder_forward.7} parent=5 // pred_region
      // Predicated region
      $region17: #{bert_encoder_forward.7} parent=15 // pred_check
        %p159 = pneg %p30
      $region18: #{bert_encoder_forward.7} parent=15 // pred_check_branch
        %161 = sbr.rel (%p159) target = $region20
      $region19: #{bert_encoder_forward.7} parent=15 // pred_region
        %p162 = scmp.lt.s32.totalorder %s10, 1
        %s163 = scalar_select %p162, %s10, 1
        %s164 = smul.addr %s163, 4
        %s165 = scalar_lea.vmem %s0, %s164
      $region20: #{bert_encoder_forward.7} parent=15 // pred_fallthru
        _
      // Predicated region
      $region21: #{bert_encoder_forward.7} parent=15 // pred_check
        %p166 = pneg %p56
      $region22: #{bert_encoder_forward.7} parent=15 // pred_check_branch
        %168 = sbr.rel (%p166) target = $region24
      $region23: #{bert_encoder_forward.7} parent=15 // pred_region
        %p169 = scmp.lt.s32.totalorder %s10, 1
        %s170 = scalar_select %p169, %s10, 1
        %s171 = smul.addr %s170, 4
        %s172 = scalar_lea.vmem %s1, %s171
      $region24: #{bert_encoder_forward.7} parent=15 // pred_fallthru
        _
      // Predicated region
      $region25: #{bert_encoder_forward.7} parent=15 // pred_check
        %p173 = pneg %p82
      $region26: #{bert_encoder_forward.7} parent=15 // pred_check_branch
        %175 = sbr.rel (%p173) target = $region28
      $region27: #{bert_encoder_forward.7} parent=15 // pred_region
        %p176 = scmp.lt.s32.totalorder %s10, 1
        %s177 = scalar_select %p176, %s10, 1
        %s178 = smul.addr %s177, 4
        %s179 = scalar_lea.vmem %s2, %s178
      $region28: #{bert_encoder_forward.7} parent=15 // pred_fallthru
        _
      // Predicated region
      $region29: #{bert_encoder_forward.7} parent=15 // pred_check
        %p180 = pneg %p108
      $region30: #{bert_encoder_forward.7} parent=15 // pred_check_branch
        %182 = sbr.rel (%p180) target = $region32
      $region31: #{bert_encoder_forward.7} parent=15 // pred_region
        %p183 = scmp.lt.s32.totalorder %s10, 1
        %s184 = scalar_select %p183, %s10, 1
        %s185 = scalar_lea.vmem %s3, %s184
      $region32: #{bert_encoder_forward.7} parent=15 // pred_fallthru
        _
    $region16: #{bert_encoder_forward.7} parent=5 // pred_fallthru
      _
    %p186 = scmp.le.s32.totalorder 1, %s10
    %p187 = scmp.lt.s32.totalorder %s10, 3
    %p188 = pnand %p186, %p187
    %p189 = pneg %p188
    // Predicated region
    $region33: #{bert_encoder_forward.7} parent=5 // pred_check
      _
    $region34: #{bert_encoder_forward.7} parent=5 // pred_check_branch
      %191 = sbr.rel (%p188) target = $region36
    $region35: #{bert_encoder_forward.7} parent=5 // pred_region
      %s192 = ssub.s32 %s10, 1
      %p193 = scmp.lt.s32.totalorder %s15, 1
      %s194 = scalar_select %p193, %s15, 1
      %s195 = smul.addr %s194, 4
      %s196 = scalar_lea.vmem %s0, %s195
      %p197 = pneg %p36
      %p198 = pneg %p33
      %p199 = scmp.lt.s32.totalorder %s15, 1
      %s200 = scalar_select %p199, %s15, 1
      %s201 = smul.addr %s200, 4
      %s202 = scalar_lea.vmem %s1, %s201
      %p203 = pneg %p62
      %p204 = pneg %p59
      %p205 = scmp.lt.s32.totalorder %s15, 1
      %s206 = scalar_select %p205, %s15, 1
      %s207 = smul.addr %s206, 4
      %s208 = scalar_lea.vmem %s2, %s207
      %p209 = pneg %p88
      %p210 = pneg %p85
      %p211 = scmp.lt.s32.totalorder %s15, 1
      %s212 = scalar_select %p211, %s15, 1
      %s213 = scalar_lea.vmem %s3, %s212
      %p214 = pneg %p114
      %p215 = pneg %p111
      %p216 = pneg %p140
      %p217 = pneg %p137
      %p218 = scmp.lt.s32.totalorder %s15, 1
      %s219 = scalar_select %p218, %s15, 1
      %s220 = smul.addr %s219, 4
      %s221 = scalar_lea.vmem %s4, %s220
      %p222 = scmp.lt.s32.totalorder %s15, 1
      %s223 = scalar_select %p222, %s15, 1
      %s224 = smul.addr %s223, 4
      %s225 = scalar_lea.vmem %s0, %s224
      %p226 = scmp.lt.s32.totalorder %s15, 1
      %s227 = scalar_select %p226, %s15, 1
      %s228 = smul.addr %s227, 4
      %s229 = scalar_lea.vmem %s1, %s228
      %p230 = scmp.lt.s32.totalorder %s15, 1
      %s231 = scalar_select %p230, %s15, 1
      %s232 = smul.addr %s231, 4
      %s233 = scalar_lea.vmem %s2, %s232
      %p234 = scmp.lt.s32.totalorder %s15, 1
      %s235 = scalar_select %p234, %s15, 1
      %s236 = scalar_lea.vmem %s3, %s235
      %p237 = scmp.lt.s32.totalorder %s15, 1
      %s238 = scalar_select %p237, %s15, 1
      %s239 = smul.addr %s238, 4
      %s240 = scalar_lea.vmem %s4, %s239
      %v242 = vld [vmem:[%s236] sm:$0x1]
      %v243 = vld [vmem:[%s225] sm:$0xf]
      %v244 = vld [vmem:[%s229] sm:$0xf]
      %v245 = vld [vmem:[%s233] sm:$0xf]
      %v247 = vlaneseq
      %v248 = vshrl.u32 %v247, 7
      %v249 = vsub.s32 0, %v248
      %v250 = vrot.slane %v242, %v249
      %vm252 = vcmask 64512
      %v254 = vsel %vm252, %v243, 0
      %v257 = vsel %vm252, %v244, 0
      %259 = vmatprep.subr.bf16.mxu0 0
      %260 = vmatpush1.bf16.xpose.msra.mxu0 %v257
      %261 = vmatprep.subr.bf16.mxu0 0
      %262 = vmatpush1.bf16.xpose.msra.mxu0 0
      %263 = vmatprep.subr.bf16.mxu0 0
      %264 = vmatpush1.bf16.xpose.msra.mxu0 0
      %265 = vmatprep.subr.bf16.mxu0 0
      %266 = vmatpush1.bf16.xpose.msra.mxu0 0
      %267 = vmatprep.subr.bf16.mxu0 0
      %268 = vmatpush1.bf16.xpose.msra.mxu0 0
      %269 = vmatprep.subr.bf16.mxu0 0
      %270 = vmatpush1.bf16.xpose.msra.mxu0 0
      %271 = vmatprep.subr.bf16.mxu0 0
      %272 = vmatpush1.bf16.xpose.msra.mxu0 0
      %273 = vmatprep.subr.bf16.mxu0 0
      %274 = vmatpush1.bf16.xpose.msra.mxu0 0
      %275 = vmatprep.subr.bf16.mxu0 0
      %276 = vmatpush1.bf16.xpose.msra.mxu0 0
      %277 = vmatprep.subr.bf16.mxu0 0
      %278 = vmatpush1.bf16.xpose.msra.mxu0 0
      %279 = vmatprep.subr.bf16.mxu0 0
      %280 = vmatpush1.bf16.xpose.msra.mxu0 0
      %281 = vmatprep.subr.bf16.mxu0 0
      %282 = vmatpush1.bf16.xpose.msra.mxu0 0
      %283 = vmatprep.subr.bf16.mxu0 0
      %284 = vmatpush1.bf16.xpose.msra.mxu0 0
      %285 = vmatprep.subr.bf16.mxu0 0
      %286 = vmatpush1.bf16.xpose.msra.mxu0 0
      %287 = vmatprep.subr.bf16.mxu0 0
      %288 = vmatpush1.bf16.xpose.msra.mxu0 0
      %289 = vmatprep.subr.bf16.mxu0 0
      %290 = vmatpush1.bf16.xpose.msra.mxu0 0
      %291 = vmatprep.mubr.bf16.mxu0 0
      %292 = vmatmul.mubr.bf16.gmra.mrb[0].mxu0 %v254
      %v293 = vpop.f32.mrb[0].mxu0
      %v294 = vadd.f32 %v250, %v293
      %v295 = vpop.f32.mrb[0].mxu0
      %v296 = vpop.f32.mrb[0].mxu0
      %v297 = vpop.f32.mrb[0].mxu0
      %298 = vdwg.mxu0
      %v299 = vsel %vm252, %v294, -inf
      %300 = vmax.xlane.f32.xlu0 %v299
      %v301 = vpop.xlane.xlu0 %300
      %v302 = vsub.f32 %v294, %v301
      %v303 = vmul.f32 %v302, 1.442695
      %v304 = vpow.pop %v303
      %v305 = vsel %vm252, %v304, 0.0
      %306 = vadd.xlane.f32.xlu0 %v305
      %v307 = vpop.xlane.xlu0 %306
      %v308 = vpack.c.bf16 %v304, %v304
      %v310 = vsel %vm252, %v308, 0
      %vm312 = vcmask 1043456
      %v314 = vsel %vm312, %v245, 0
      %316 = vmatprep.subr.bf16.mxu0 0
      %317 = vmatpush1.bf16.msra.mxu0 %v314
      %318 = vmatprep.subr.bf16.mxu0 0
      %319 = vmatpush1.bf16.msra.mxu0 0
      %320 = vmatprep.subr.bf16.mxu0 0
      %321 = vmatpush1.bf16.msra.mxu0 0
      %322 = vmatprep.subr.bf16.mxu0 0
      %323 = vmatpush1.bf16.msra.mxu0 0
      %324 = vmatprep.subr.bf16.mxu0 0
      %325 = vmatpush1.bf16.msra.mxu0 0
      %326 = vmatprep.subr.bf16.mxu0 0
      %327 = vmatpush1.bf16.msra.mxu0 0
      %328 = vmatprep.subr.bf16.mxu0 0
      %329 = vmatpush1.bf16.msra.mxu0 0
      %330 = vmatprep.subr.bf16.mxu0 0
      %331 = vmatpush1.bf16.msra.mxu0 0
      %332 = vmatprep.subr.bf16.mxu0 0
      %333 = vmatpush1.bf16.msra.mxu0 0
      %334 = vmatprep.subr.bf16.mxu0 0
      %335 = vmatpush1.bf16.msra.mxu0 0
      %336 = vmatprep.subr.bf16.mxu0 0
      %337 = vmatpush1.bf16.msra.mxu0 0
      %338 = vmatprep.subr.bf16.mxu0 0
      %339 = vmatpush1.bf16.msra.mxu0 0
      %340 = vmatprep.subr.bf16.mxu0 0
      %341 = vmatpush1.bf16.msra.mxu0 0
      %342 = vmatprep.subr.bf16.mxu0 0
      %343 = vmatpush1.bf16.msra.mxu0 0
      %344 = vmatprep.subr.bf16.mxu0 0
      %345 = vmatpush1.bf16.msra.mxu0 0
      %346 = vmatprep.subr.bf16.mxu0 0
      %347 = vmatpush1.bf16.msra.mxu0 0
      %348 = vmatprep.mubr.bf16.mxu0 0
      %349 = vmatmul.mubr.bf16.gmra.mrb[0].mxu0 %v310
      %v350 = vpop.f32.mrb[0].mxu0
      %v351 = vadd.f32 0.0, %v350
      %v352 = vpop.f32.mrb[0].mxu0
      %v353 = vpop.f32.mrb[0].mxu0
      %v354 = vpop.f32.mrb[0].mxu0
      %355 = vdwg.mxu0
      %v356 = vrcp.pop %v307
      %v357 = vmul.f32 %v351, %v356
      %v359 = vunpack.c.l.b16 %v243
      %v360 = vpack.c.b16 %v359, %v359
      %361 = vrot.lane.b32.xlu0 %v360, 120
      %v362 = vpop.permute.xlu0 %361
      %v364 = vunpack.c.l.b16 %v244
      %v365 = vpack.c.b16 %v364, %v364
      %366 = vrot.lane.b32.xlu0 %v365, 120
      %v367 = vpop.permute.xlu0 %366
      %v369 = vsel %vm252, %v362, 0
      %v372 = vsel %vm252, %v367, 0
      %374 = vmatprep.subr.bf16.mxu0 0
      %375 = vmatpush1.bf16.xpose.msra.mxu0 %v372
      %376 = vmatprep.subr.bf16.mxu0 0
      %377 = vmatpush1.bf16.xpose.msra.mxu0 0
      %378 = vmatprep.subr.bf16.mxu0 0
      %379 = vmatpush1.bf16.xpose.msra.mxu0 0
      %380 = vmatprep.subr.bf16.mxu0 0
      %381 = vmatpush1.bf16.xpose.msra.mxu0 0
      %382 = vmatprep.subr.bf16.mxu0 0
      %383 = vmatpush1.bf16.xpose.msra.mxu0 0
      %384 = vmatprep.subr.bf16.mxu0 0
      %385 = vmatpush1.bf16.xpose.msra.mxu0 0
      %386 = vmatprep.subr.bf16.mxu0 0
      %387 = vmatpush1.bf16.xpose.msra.mxu0 0
      %388 = vmatprep.subr.bf16.mxu0 0
      %389 = vmatpush1.bf16.xpose.msra.mxu0 0
      %390 = vmatprep.subr.bf16.mxu0 0
      %391 = vmatpush1.bf16.xpose.msra.mxu0 0
      %392 = vmatprep.subr.bf16.mxu0 0
      %393 = vmatpush1.bf16.xpose.msra.mxu0 0
      %394 = vmatprep.subr.bf16.mxu0 0
      %395 = vmatpush1.bf16.xpose.msra.mxu0 0
      %396 = vmatprep.subr.bf16.mxu0 0
      %397 = vmatpush1.bf16.xpose.msra.mxu0 0
      %398 = vmatprep.subr.bf16.mxu0 0
      %399 = vmatpush1.bf16.xpose.msra.mxu0 0
      %400 = vmatprep.subr.bf16.mxu0 0
      %401 = vmatpush1.bf16.xpose.msra.mxu0 0
      %402 = vmatprep.subr.bf16.mxu0 0
      %403 = vmatpush1.bf16.xpose.msra.mxu0 0
      %404 = vmatprep.subr.bf16.mxu0 0
      %405 = vmatpush1.bf16.xpose.msra.mxu0 0
      %406 = vmatprep.mubr.bf16.mxu0 0
      %407 = vmatmul.mubr.bf16.gmra.mrb[0].mxu0 %v369
      %v408 = vpop.f32.mrb[0].mxu0
      %v409 = vadd.f32 %v250, %v408
      %v410 = vpop.f32.mrb[0].mxu0
      %v411 = vpop.f32.mrb[0].mxu0
      %v412 = vpop.f32.mrb[0].mxu0
      %413 = vdwg.mxu0
      %v414 = vsel %vm252, %v409, -inf
      %415 = vmax.xlane.f32.xlu0 %v414
      %v416 = vpop.xlane.xlu0 %415
      %v417 = vsub.f32 %v409, %v416
      %v418 = vmul.f32 %v417, 1.442695
      %v419 = vpow.pop %v418
      %v420 = vsel %vm252, %v419, 0.0
      %421 = vadd.xlane.f32.xlu0 %v420
      %v422 = vpop.xlane.xlu0 %421
      %v423 = vpack.c.bf16 %v419, %v419
      %v425 = vunpack.c.l.b16 %v245
      %v426 = vpack.c.b16 %v425, %v425
      %427 = vrot.lane.b32.xlu0 %v426, 120
      %v428 = vpop.permute.xlu0 %427
      %v430 = vsel %vm252, %v423, 0
      %v433 = vsel %vm312, %v428, 0
      %435 = vmatprep.subr.bf16.mxu0 0
      %436 = vmatpush1.bf16.msra.mxu0 %v433
      %437 = vmatprep.subr.bf16.mxu0 0
      %438 = vmatpush1.bf16.msra.mxu0 0
      %439 = vmatprep.subr.bf16.mxu0 0
      %440 = vmatpush1.bf16.msra.mxu0 0
      %441 = vmatprep.subr.bf16.mxu0 0
      %442 = vmatpush1.bf16.msra.mxu0 0
      %443 = vmatprep.subr.bf16.mxu0 0
      %444 = vmatpush1.bf16.msra.mxu0 0
      %445 = vmatprep.subr.bf16.mxu0 0
      %446 = vmatpush1.bf16.msra.mxu0 0
      %447 = vmatprep.subr.bf16.mxu0 0
      %448 = vmatpush1.bf16.msra.mxu0 0
      %449 = vmatprep.subr.bf16.mxu0 0
      %450 = vmatpush1.bf16.msra.mxu0 0
      %451 = vmatprep.subr.bf16.mxu0 0
      %452 = vmatpush1.bf16.msra.mxu0 0
      %453 = vmatprep.subr.bf16.mxu0 0
      %454 = vmatpush1.bf16.msra.mxu0 0
      %455 = vmatprep.subr.bf16.mxu0 0
      %456 = vmatpush1.bf16.msra.mxu0 0
      %457 = vmatprep.subr.bf16.mxu0 0
      %458 = vmatpush1.bf16.msra.mxu0 0
      %459 = vmatprep.subr.bf16.mxu0 0
      %460 = vmatpush1.bf16.msra.mxu0 0
      %461 = vmatprep.subr.bf16.mxu0 0
      %462 = vmatpush1.bf16.msra.mxu0 0
      %463 = vmatprep.subr.bf16.mxu0 0
      %464 = vmatpush1.bf16.msra.mxu0 0
      %465 = vmatprep.subr.bf16.mxu0 0
      %466 = vmatpush1.bf16.msra.mxu0 0
      %467 = vmatprep.mubr.bf16.mxu0 0
      %468 = vmatmul.mubr.bf16.gmra.mrb[0].mxu0 %v430
      %v469 = vpop.f32.mrb[0].mxu0
      %v470 = vadd.f32 0.0, %v469
      %v471 = vpop.f32.mrb[0].mxu0
      %v472 = vpop.f32.mrb[0].mxu0
      %v473 = vpop.f32.mrb[0].mxu0
      %474 = vdwg.mxu0
      %v475 = vrcp.pop %v422
      %v476 = vmul.f32 %v470, %v475
      %477 = vrot.lane.b32.xlu0 %v360, 112
      %v478 = vpop.permute.xlu0 %477
      %479 = vrot.lane.b32.xlu0 %v365, 112
      %v480 = vpop.permute.xlu0 %479
      %v482 = vsel %vm252, %v478, 0
      %v485 = vsel %vm252, %v480, 0
      %487 = vmatprep.subr.bf16.mxu0 0
      %488 = vmatpush1.bf16.xpose.msra.mxu0 %v485
      %489 = vmatprep.subr.bf16.mxu0 0
      %490 = vmatpush1.bf16.xpose.msra.mxu0 0
      %491 = vmatprep.subr.bf16.mxu0 0
      %492 = vmatpush1.bf16.xpose.msra.mxu0 0
      %493 = vmatprep.subr.bf16.mxu0 0
      %494 = vmatpush1.bf16.xpose.msra.mxu0 0
      %495 = vmatprep.subr.bf16.mxu0 0
      %496 = vmatpush1.bf16.xpose.msra.mxu0 0
      %497 = vmatprep.subr.bf16.mxu0 0
      %498 = vmatpush1.bf16.xpose.msra.mxu0 0
      %499 = vmatprep.subr.bf16.mxu0 0
      %500 = vmatpush1.bf16.xpose.msra.mxu0 0
      %501 = vmatprep.subr.bf16.mxu0 0
      %502 = vmatpush1.bf16.xpose.msra.mxu0 0
      %503 = vmatprep.subr.bf16.mxu0 0
      %504 = vmatpush1.bf16.xpose.msra.mxu0 0
      %505 = vmatprep.subr.bf16.mxu0 0
      %506 = vmatpush1.bf16.xpose.msra.mxu0 0
      %507 = vmatprep.subr.bf16.mxu0 0
      %508 = vmatpush1.bf16.xpose.msra.mxu0 0
      %509 = vmatprep.subr.bf16.mxu0 0
      %510 = vmatpush1.bf16.xpose.msra.mxu0 0
      %511 = vmatprep.subr.bf16.mxu0 0
      %512 = vmatpush1.bf16.xpose.msra.mxu0 0
      %513 = vmatprep.subr.bf16.mxu0 0
      %514 = vmatpush1.bf16.xpose.msra.mxu0 0
      %515 = vmatprep.subr.bf16.mxu0 0
      %516 = vmatpush1.bf16.xpose.msra.mxu0 0
      %517 = vmatprep.subr.bf16.mxu0 0
      %518 = vmatpush1.bf16.xpose.msra.mxu0 0
      %519 = vmatprep.mubr.bf16.mxu0 0
      %520 = vmatmul.mubr.bf16.gmra.mrb[0].mxu0 %v482
      %v521 = vpop.f32.mrb[0].mxu0
      %v522 = vadd.f32 %v250, %v521
      %v523 = vpop.f32.mrb[0].mxu0
      %v524 = vpop.f32.mrb[0].mxu0
      %v525 = vpop.f32.mrb[0].mxu0
      %526 = vdwg.mxu0
      %v527 = vsel %vm252, %v522, -inf
      %528 = vmax.xlane.f32.xlu0 %v527
      %v529 = vpop.xlane.xlu0 %528
      %v530 = vsub.f32 %v522, %v529
      %v531 = vmul.f32 %v530, 1.442695
      %v532 = vpow.pop %v531
      %v533 = vsel %vm252, %v532, 0.0
      %534 = vadd.xlane.f32.xlu0 %v533
      %v535 = vpop.xlane.xlu0 %534
      %v536 = vpack.c.bf16 %v532, %v532
      %537 = vrot.lane.b32.xlu0 %v426, 112
      %v538 = vpop.permute.xlu0 %537
      %v540 = vsel %vm252, %v536, 0
      %v543 = vsel %vm312, %v538, 0
      %545 = vmatprep.subr.bf16.mxu0 0
      %546 = vmatpush1.bf16.msra.mxu0 %v543
      %547 = vmatprep.subr.bf16.mxu0 0
      %548 = vmatpush1.bf16.msra.mxu0 0
      %549 = vmatprep.subr.bf16.mxu0 0
      %550 = vmatpush1.bf16.msra.mxu0 0
      %551 = vmatprep.subr.bf16.mxu0 0
      %552 = vmatpush1.bf16.msra.mxu0 0
      %553 = vmatprep.subr.bf16.mxu0 0
      %554 = vmatpush1.bf16.msra.mxu0 0
      %555 = vmatprep.subr.bf16.mxu0 0
      %556 = vmatpush1.bf16.msra.mxu0 0
      %557 = vmatprep.subr.bf16.mxu0 0
      %558 = vmatpush1.bf16.msra.mxu0 0
      %559 = vmatprep.subr.bf16.mxu0 0
      %560 = vmatpush1.bf16.msra.mxu0 0
      %561 = vmatprep.subr.bf16.mxu0 0
      %562 = vmatpush1.bf16.msra.mxu0 0
      %563 = vmatprep.subr.bf16.mxu0 0
      %564 = vmatpush1.bf16.msra.mxu0 0
      %565 = vmatprep.subr.bf16.mxu0 0
      %566 = vmatpush1.bf16.msra.mxu0 0
      %567 = vmatprep.subr.bf16.mxu0 0
      %568 = vmatpush1.bf16.msra.mxu0 0
      %569 = vmatprep.subr.bf16.mxu0 0
      %570 = vmatpush1.bf16.msra.mxu0 0
      %571 = vmatprep.subr.bf16.mxu0 0
      %572 = vmatpush1.bf16.msra.mxu0 0
      %573 = vmatprep.subr.bf16.mxu0 0
      %574 = vmatpush1.bf16.msra.mxu0 0
      %575 = vmatprep.subr.bf16.mxu0 0
      %576 = vmatpush1.bf16.msra.mxu0 0
      %577 = vmatprep.mubr.bf16.mxu0 0
      %578 = vmatmul.mubr.bf16.gmra.mrb[0].mxu0 %v540
      %v579 = vpop.f32.mrb[0].mxu0
      %v580 = vadd.f32 0.0, %v579
      %v581 = vpop.f32.mrb[0].mxu0
      %v582 = vpop.f32.mrb[0].mxu0
      %v583 = vpop.f32.mrb[0].mxu0
      %584 = vdwg.mxu0
      %v585 = vrcp.pop %v535
      %v586 = vmul.f32 %v580, %v585
      %587 = vrot.lane.b32.xlu0 %v360, 104
      %v588 = vpop.permute.xlu0 %587
      %589 = vrot.lane.b32.xlu0 %v365, 104
      %v590 = vpop.permute.xlu0 %589
      %v592 = vsel %vm252, %v588, 0
      %v595 = vsel %vm252, %v590, 0
      %597 = vmatprep.subr.bf16.mxu0 0
      %598 = vmatpush1.bf16.xpose.msra.mxu0 %v595
      %599 = vmatprep.subr.bf16.mxu0 0
      %600 = vmatpush1.bf16.xpose.msra.mxu0 0
      %601 = vmatprep.subr.bf16.mxu0 0
      %602 = vmatpush1.bf16.xpose.msra.mxu0 0
      %603 = vmatprep.subr.bf16.mxu0 0
      %604 = vmatpush1.bf16.xpose.msra.mxu0 0
      %605 = vmatprep.subr.bf16.mxu0 0
      %606 = vmatpush1.bf16.xpose.msra.mxu0 0
      %607 = vmatprep.subr.bf16.mxu0 0
      %608 = vmatpush1.bf16.xpose.msra.mxu0 0
      %609 = vmatprep.subr.bf16.mxu0 0
      %610 = vmatpush1.bf16.xpose.msra.mxu0 0
      %611 = vmatprep.subr.bf16.mxu0 0
      %612 = vmatpush1.bf16.xpose.msra.mxu0 0
      %613 = vmatprep.subr.bf16.mxu0 0
      %614 = vmatpush1.bf16.xpose.msra.mxu0 0
      %615 = vmatprep.subr.bf16.mxu0 0
      %616 = vmatpush1.bf16.xpose.msra.mxu0 0
      %617 = vmatprep.subr.bf16.mxu0 0
      %618 = vmatpush1.bf16.xpose.msra.mxu0 0
      %619 = vmatprep.subr.bf16.mxu0 0
      %620 = vmatpush1.bf16.xpose.msra.mxu0 0
      %621 = vmatprep.subr.bf16.mxu0 0
      %622 = vmatpush1.bf16.xpose.msra.mxu0 0
      %623 = vmatprep.subr.bf16.mxu0 0
      %624 = vmatpush1.bf16.xpose.msra.mxu0 0
      %625 = vmatprep.subr.bf16.mxu0 0
      %626 = vmatpush1.bf16.xpose.msra.mxu0 0
      %627 = vmatprep.subr.bf16.mxu0 0
      %628 = vmatpush1.bf16.xpose.msra.mxu0 0
      %629 = vmatprep.mubr.bf16.mxu0 0
      %630 = vmatmul.mubr.bf16.gmra.mrb[0].mxu0 %v592
      %v631 = vpop.f32.mrb[0].mxu0
      %v632 = vadd.f32 %v250, %v631
      %v633 = vpop.f32.mrb[0].mxu0
      %v634 = vpop.f32.mrb[0].mxu0
      %v635 = vpop.f32.mrb[0].mxu0
      %636 = vdwg.mxu0
      %v637 = vsel %vm252, %v632, -inf
      %638 = vmax.xlane.f32.xlu0 %v637
      %v639 = vpop.xlane.xlu0 %638
      %v640 = vsub.f32 %v632, %v639
      %v641 = vmul.f32 %v640, 1.442695
      %v642 = vpow.pop %v641
      %v643 = vsel %vm252, %v642, 0.0
      %644 = vadd.xlane.f32.xlu0 %v643
      %v645 = vpop.xlane.xlu0 %644
      %v646 = vpack.c.bf16 %v642, %v642
      %647 = vrot.lane.b32.xlu0 %v426, 104
      %v648 = vpop.permute.xlu0 %647
      %v650 = vsel %vm252, %v646, 0
      %v653 = vsel %vm312, %v648, 0
      %655 = vmatprep.subr.bf16.mxu0 0
      %656 = vmatpush1.bf16.msra.mxu0 %v653
      %657 = vmatprep.subr.bf16.mxu0 0
      %658 = vmatpush1.bf16.msra.mxu0 0
      %659 = vmatprep.subr.bf16.mxu0 0
      %660 = vmatpush1.bf16.msra.mxu0 0
      %661 = vmatprep.subr.bf16.mxu0 0
      %662 = vmatpush1.bf16.msra.mxu0 0
      %663 = vmatprep.subr.bf16.mxu0 0
      %664 = vmatpush1.bf16.msra.mxu0 0
      %665 = vmatprep.subr.bf16.mxu0 0
      %666 = vmatpush1.bf16.msra.mxu0 0
      %667 = vmatprep.subr.bf16.mxu0 0
      %668 = vmatpush1.bf16.msra.mxu0 0
      %669 = vmatprep.subr.bf16.mxu0 0
      %670 = vmatpush1.bf16.msra.mxu0 0
      %671 = vmatprep.subr.bf16.mxu0 0
      %672 = vmatpush1.bf16.msra.mxu0 0
      %673 = vmatprep.subr.bf16.mxu0 0
      %674 = vmatpush1.bf16.msra.mxu0 0
      %675 = vmatprep.subr.bf16.mxu0 0
      %676 = vmatpush1.bf16.msra.mxu0 0
      %677 = vmatprep.subr.bf16.mxu0 0
      %678 = vmatpush1.bf16.msra.mxu0 0
      %679 = vmatprep.subr.bf16.mxu0 0
      %680 = vmatpush1.bf16.msra.mxu0 0
      %681 = vmatprep.subr.bf16.mxu0 0
      %682 = vmatpush1.bf16.msra.mxu0 0
      %683 = vmatprep.subr.bf16.mxu0 0
      %684 = vmatpush1.bf16.msra.mxu0 0
      %685 = vmatprep.subr.bf16.mxu0 0
      %686 = vmatpush1.bf16.msra.mxu0 0
      %687 = vmatprep.mubr.bf16.mxu0 0
      %688 = vmatmul.mubr.bf16.gmra.mrb[0].mxu0 %v650
      %v689 = vpop.f32.mrb[0].mxu0
      %v690 = vadd.f32 0.0, %v689
      %v691 = vpop.f32.mrb[0].mxu0
      %v692 = vpop.f32.mrb[0].mxu0
      %v693 = vpop.f32.mrb[0].mxu0
      %694 = vdwg.mxu0
      %v695 = vrcp.pop %v645
      %v696 = vmul.f32 %v690, %v695
      %698 = vrot.lane.b32.xlu0 %v476, 8
      %v699 = vpop.permute.xlu0 %698
      %702 = vrot.lane.b32.xlu0 %v586, 16
      %v703 = vpop.permute.xlu0 %702
      %706 = vrot.lane.b32.xlu0 %v696, 24
      %v707 = vpop.permute.xlu0 %706
      %v709 = vsel %vm252, %v357, %v699
      %vm710 = vcmask 130048
      %v711 = vsel %vm710, %v709, %v703
      %vm712 = vcmask 195584
      %v713 = vsel %vm712, %v711, %v707
      %v714 = vpack.c.bf16 %v713, %v713
      %vm715 = vcmask 257024
      %716 = vst.msk [vmem:[%s240] sm:$0xf] %vm715, %v714
      %p717 = scmp.lt.s32.totalorder %s15, 1
      %s718 = scalar_select %p717, %s15, 1
      %s719 = smul.addr %s718, 4
      %s720 = scalar_lea.vmem %s4, %s719
      // Predicated region
      $region37: #{bert_encoder_forward.7} parent=35 // pred_check
        %p721 = pneg %p137
      $region38: #{bert_encoder_forward.7} parent=35 // pred_check_branch
        %723 = sbr.rel (%p721) target = $region40
      $region39: #{bert_encoder_forward.7} parent=35 // pred_region
        _
      $region40: #{bert_encoder_forward.7} parent=35 // pred_fallthru
        _
    $region36: #{bert_encoder_forward.7} parent=5 // pred_fallthru
      _
    %p724 = scmp.le.s32.totalorder 2, %s10
    // Predicated region
    $region41: #{bert_encoder_forward.7} parent=5 // pred_check
      %p725 = pneg %p724
    $region42: #{bert_encoder_forward.7} parent=5 // pred_check_branch
      %727 = sbr.rel (%p725) target = $region44
    $region43: #{bert_encoder_forward.7} parent=5 // pred_region
      %s728 = ssub.s32 %s10, 2
      // Predicated region
      $region45: #{bert_encoder_forward.7} parent=43 // pred_check
        %p729 = pneg %p143
      $region46: #{bert_encoder_forward.7} parent=43 // pred_check_branch
        %731 = sbr.rel (%p729) target = $region48
      $region47: #{bert_encoder_forward.7} parent=43 // pred_region
        %p732 = scmp.lt.s32.totalorder %s16, 1
        %s733 = scalar_select %p732, %s16, 1
        %s734 = smul.addr %s733, 4
        %s735 = scalar_lea.vmem %s4, %s734
      $region48: #{bert_encoder_forward.7} parent=43 // pred_fallthru
        _
    $region44: #{bert_encoder_forward.7} parent=5 // pred_fallthru
      _
  $region6: #{bert_encoder_forward.7} parent=0 // loop_footer
    %s14 = sadd.s32 1, %s10
  $region7: #{bert_encoder_forward.7} parent=0 // loop_footer_branch
    %9 = sbr.rel target = $region3
  $region8: #{bert_encoder_forward.7} parent=0 // loop_exit
    _

</llo_original>
